<compile_context>
chip_gen: v5e
topology: v5e:2x2
jax: 0.10.0
libtpu: 0.0.40
codegen_flags: <defaults>
</compile_context>

<pallas_src>
import functools

import jax
import jax.numpy as jnp
from jax.experimental import pallas as pl
from jax.experimental.pallas import tpu as pltpu


_NWAYS = 2  # row-axis grid ways -> both v7x TensorCores; harmless on 1-TC chips


def _round_up(x, m):
    return (x + m - 1) // m * m


def _mxu_align(x):
    # 128 lanes minimum; 256 for larger dims so the 2x256x256 MXUs on v6e/v7x
    # see full-width operands (256 is still 128-aligned, fine on v5e).
    return _round_up(x, 256) if x > 128 else _round_up(x, 128)


def _vmem_limits():
    """(vmem_limit_bytes, per-call tile working-set budget), generation aware."""
    cap = 64 * 1024 * 1024                      # conservative fallback (v7x physical)
    try:
        cap = int(pltpu.get_tpu_info().vmem_capacity_bytes)
    except Exception:
        pass
    limit = max(32 * 1024 * 1024, min(cap - 16 * 1024 * 1024, 100 * 1024 * 1024))
    return int(limit), int(limit) // 2


def _pick_tile_rows(rows, stream_bytes_per_row, resident_bytes, budget, max_tile):
    """Largest row tile whose double-buffered streams + resident data fit."""
    tile = max_tile
    while tile > 8 and resident_bytes + 2 * tile * stream_bytes_per_row > budget:
        tile //= 2
    per_way = _round_up(-(-rows // _NWAYS), 8)  # ceil(rows / ways), 8-aligned
    return max(8, min(tile, per_way))


# ----------------------------- Pallas kernels ------------------------------ #

def _pconv_keep_kernel(pimg_ref, ratio_ref, umask_ref, w_ref, b_ref,
                       conv_ref, sum_ref, sumsq_ref):
    """Kept rows: partial conv (MXU), store conv rows, accumulate BN partials."""
    @pl.when(pl.program_id(1) == 0)
    def _init():
        sum_ref[...] = jnp.zeros_like(sum_ref)
        sumsq_ref[...] = jnp.zeros_like(sumsq_ref)

    raw = jnp.dot(pimg_ref[...], w_ref[...], preferred_element_type=jnp.float32)
    # PartialConv2d: out = (conv(img*mask) * mask_ratio + bias) * update_mask.
    # Zero-padded rows have ratio = update_mask = 0 -> contribute nothing.
    out = (raw * ratio_ref[...] + b_ref[...]) * umask_ref[...]
    conv_ref[...] = out
    sum_ref[...] += jnp.sum(out, axis=0, keepdims=True)
    sumsq_ref[...] += jnp.sum(out * out, axis=0, keepdims=True)


def _pconv_stats_kernel(pimg_ref, ratio_ref, umask_ref, w_ref, b_ref,
                        sum_ref, sumsq_ref):
    """Remaining rows: partial conv (MXU) only to accumulate BN partials."""
    @pl.when(pl.program_id(1) == 0)
    def _init():
        sum_ref[...] = jnp.zeros_like(sum_ref)
        sumsq_ref[...] = jnp.zeros_like(sumsq_ref)

    raw = jnp.dot(pimg_ref[...], w_ref[...], preferred_element_type=jnp.float32)
    out = (raw * ratio_ref[...] + b_ref[...]) * umask_ref[...]
    sum_ref[...] += jnp.sum(out, axis=0, keepdims=True)
    sumsq_ref[...] += jnp.sum(out * out, axis=0, keepdims=True)


def _bn_relu_kernel(conv_ref, p_ref, out_ref):
    """Pure-VPU BN scale/shift + ReLU over stored conv rows; bf16 writeback."""
    y = conv_ref[...] * p_ref[0:1, :] + p_ref[1:2, :]
    out_ref[...] = jnp.maximum(y, 0.0).astype(out_ref.dtype)


# ------------------------------- glue (JAX) -------------------------------- #

def _im2col_slab(xp, kh, kw, stride, spec):
    """xp: (N, C, Hp, Wp) padded bf16 image*mask. spec = (oh0, ohn, ohs, ow0, own, ows)."""
    # TODO(synk): fold im2col into the kernel (pl.ANY image ref + per-tap DMA /
    # accumulating matmuls) so HBM never holds the KHxKW-duplicated patches.
    oh0, ohn, ohs, ow0, own, ows = spec
    n, c = xp.shape[0], xp.shape[1]
    rstep, cstep = stride * ohs, stride * ows
    taps = []
    for i in range(kh):
        for j in range(kw):
            r0 = oh0 * stride + i
            c0 = ow0 * stride + j
            taps.append(xp[:, :, r0:r0 + rstep * ohn:rstep,
                               c0:c0 + cstep * own:cstep])
    pat = jnp.stack(taps, axis=2)                 # (N, C, T, ohn, own)
    pat = pat.transpose(0, 3, 4, 1, 2)            # (N, ohn, own, C, T)
    return pat.reshape(n * ohn * own, c * kh * kw)


def _grid_slab(a, spec):
    """a: (N, OH, OW) -> flat (rows,) selection in the same row order as the slab."""
    oh0, ohn, ohs, ow0, own, ows = spec
    return a[:, oh0:oh0 + ohs * ohn:ohs, ow0:ow0 + ows * own:ows].reshape(-1)


def _mask_window_sum(mask, kh, kw, stride, pad):
    """Sum of the mask over (Cin, KH, KW) per output position: (N, OH, OW)."""
    n, c, h, w = mask.shape
    m = jnp.sum(mask, axis=1)
    mp = jnp.pad(m, ((0, 0), (pad, pad), (pad, pad)))
    oh = (h + 2 * pad - kh) // stride + 1
    ow = (w + 2 * pad - kw) // stride + 1
    s = jnp.zeros((n, oh, ow), mask.dtype)
    for i in range(kh):
        for j in range(kw):
            s = s + mp[:, i:i + stride * oh:stride, j:j + stride * ow:stride]
    return s, oh, ow


def _pad_rows_cols(x, rows, cols):
    return jnp.pad(x, ((0, rows - x.shape[0]), (0, cols - x.shape[1])))


def _col(v, rows):
    col = v.astype(jnp.float32).reshape(-1, 1)
    return jnp.pad(col, ((0, rows - col.shape[0]), (0, 0)))


def pconv_encoder_forward(img, mask_in, weight, bias, gamma, beta,
                          *, kernel_size, stride, padding, bn_eps=1e-5):
    """img, mask_in: (N, Cin, H, W). weight: (Cout, Cin, KH, KW).
    Returns (up_img, up_mask) in NCHW, matching PConvEncoder.forward."""
    n, cin, h, w = img.shape
    cout = weight.shape[0]
    kh = kw = kernel_size
    slide_winsize = float(cin * kh * kw)

    msum, oh, ow = _mask_window_sum(mask_in, kh, kw, stride, padding)
    umask = jnp.clip(msum, 0.0, 1.0)
    ratio = (slide_winsize / (msum + 1e-8)) * umask      # mask_ratio * update_mask

    doh, dow = oh // 2, ow // 2
    r = n * oh * ow
    r2 = n * doh * dow
    k = cin * kh * kw
    kp = _mxu_align(k)
    cp = _mxu_align(cout)

    # ---- row partition: rows kept by the 0.5x nearest downsample lead ------
    keep_spec = (0, doh, 2, 0, dow, 2)
    rest_specs = []
    if ow // 2 > 0:
        rest_specs.append((0, doh, 2, 1, ow // 2, 2))    # kept oh x odd ow
    if ow % 2 == 1:
        rest_specs.append((0, doh, 2, 2 * dow, 1, 1))    # kept oh x last even ow
    if oh // 2 > 0:
        rest_specs.append((1, oh // 2, 2, 0, ow, 1))     # odd oh x all ow
    if oh % 2 == 1:
        rest_specs.append((2 * doh, 1, 1, 0, ow, 1))     # last even oh x all ow
    rest_specs = [s for s in rest_specs if s[1] > 0 and s[4] > 0]
    rr = sum(n * s[1] * s[4] for s in rest_specs)
    assert r2 + rr == r

    # img*mask cast to bf16 once; all patches are sliced directly from this.
    xp = jnp.pad((img * mask_in).astype(jnp.bfloat16),
                 ((0, 0), (0, 0), (padding, padding), (padding, padding)))

    # TODO(synk): optional fp8 (e4m3, scaled) patch/weight path for the v7x MXU.
    w2d = weight.reshape(cout, k).T.astype(jnp.bfloat16)                 # (K, Cout)
    w_p = _pad_rows_cols(w2d, kp, cp)                                    # (Kp, Cp)
    b_p = _pad_rows_cols(bias.reshape(1, cout).astype(jnp.float32), 1, cp)

    vmem_limit, tile_budget = _vmem_limits()
    # TODO(synk): pipeline_mode=pl.Buffered(1) on the constant-index weight /
    # bias specs would keep a single resident copy; charge two copies for now.
    w_resident = 2 * kp * cp * 2 + 4 * cp * 4

    def _row_map(steps):
        return lambda i, j: (i * steps + j, 0)

    def _const_map(i, j):
        return (0, 0)

    def _way_map(i, j):
        return (i, 0)

    # ----------------- call A: kept rows (conv rows + BN partials) ----------
    keep_bpr = kp * 2 + cp * 4 + 2 * 4          # bf16 patches + f32 conv + 2 cols
    tile_a = _pick_tile_rows(r2, keep_bpr, w_resident, tile_budget, max_tile=1024)
    r2p = _round_up(max(r2, 1), _NWAYS * tile_a)
    steps_a = r2p // (_NWAYS * tile_a)

    patches_keep = _pad_rows_cols(_im2col_slab(xp, kh, kw, stride, keep_spec), r2p, kp)
    ratio_keep = _col(_grid_slab(ratio, keep_spec), r2p)
    umask_keep_flat = _grid_slab(umask, keep_spec)
    umask_keep = _col(umask_keep_flat, r2p)

    conv_rows, ssum_a, ssq_a = pl.pallas_call(
        _pconv_keep_kernel,
        out_shape=(jax.ShapeDtypeStruct((r2p, cp), jnp.float32),
                   jax.ShapeDtypeStruct((_NWAYS * 8, cp), jnp.float32),
                   jax.ShapeDtypeStruct((_NWAYS * 8, cp), jnp.float32)),
        grid_spec=pltpu.PrefetchScalarGridSpec(
            num_scalar_prefetch=0,
            grid=(_NWAYS, steps_a),
            in_specs=[pl.BlockSpec((tile_a, kp), _row_map(steps_a)),
                      pl.BlockSpec((tile_a, 1), _row_map(steps_a)),
                      pl.BlockSpec((tile_a, 1), _row_map(steps_a)),
                      pl.BlockSpec((kp, cp), _const_map),
                      pl.BlockSpec((1, cp), _const_map)],
            out_specs=[pl.BlockSpec((tile_a, cp), _row_map(steps_a)),
                       pl.BlockSpec((8, cp), _way_map),
                       pl.BlockSpec((8, cp), _way_map)]),
        compiler_params=pltpu.CompilerParams(
            dimension_semantics=("parallel", "arbitrary"),
            vmem_limit_bytes=vmem_limit),
    )(patches_keep, ratio_keep, umask_keep, w_p, b_p)

    sum_tot = ssum_a[::8].sum(axis=0)
    sq_tot = ssq_a[::8].sum(axis=0)

    # ----------------- call B: remaining rows (BN partials only) ------------
    if rr > 0:
        rest_bpr = kp * 2 + 2 * 4
        tile_b = _pick_tile_rows(rr, rest_bpr, w_resident, tile_budget, max_tile=4096)
        rrp = _round_up(rr, _NWAYS * tile_b)
        steps_b = rrp // (_NWAYS * tile_b)

        patches_rest = _pad_rows_cols(
            jnp.concatenate(
                [_im2col_slab(xp, kh, kw, stride, s) for s in rest_specs], axis=0),
            rrp, kp)
        ratio_rest = _col(
            jnp.concatenate([_grid_slab(ratio, s) for s in rest_specs]), rrp)
        umask_rest = _col(
            jnp.concatenate([_grid_slab(umask, s) for s in rest_specs]), rrp)

        ssum_b, ssq_b = pl.pallas_call(
            _pconv_stats_kernel,
            out_shape=(jax.ShapeDtypeStruct((_NWAYS * 8, cp), jnp.float32),
                       jax.ShapeDtypeStruct((_NWAYS * 8, cp), jnp.float32)),
            grid_spec=pltpu.PrefetchScalarGridSpec(
                num_scalar_prefetch=0,
                grid=(_NWAYS, steps_b),
                in_specs=[pl.BlockSpec((tile_b, kp), _row_map(steps_b)),
                          pl.BlockSpec((tile_b, 1), _row_map(steps_b)),
                          pl.BlockSpec((tile_b, 1), _row_map(steps_b)),
                          pl.BlockSpec((kp, cp), _const_map),
                          pl.BlockSpec((1, cp), _const_map)],
                out_specs=[pl.BlockSpec((8, cp), _way_map),
                           pl.BlockSpec((8, cp), _way_map)]),
            compiler_params=pltpu.CompilerParams(
                dimension_semantics=("parallel", "arbitrary"),
                vmem_limit_bytes=vmem_limit),
        )(patches_rest, ratio_rest, umask_rest, w_p, b_p)
        sum_tot = sum_tot + ssum_b[::8].sum(axis=0)
        sq_tot = sq_tot + ssq_b[::8].sum(axis=0)

    # -------------- BN affine (tiny (Cp,) math in the wrapper) --------------
    mean = sum_tot / float(r)
    var = jnp.maximum(sq_tot / float(r) - mean * mean, 0.0)
    # TODO(synk): shifted / Welford accumulation for very large N*OH*OW to
    # avoid E[x^2] - mean^2 cancellation; f32 is fine at these sizes.
    g_p = _pad_rows_cols(gamma.reshape(1, cout).astype(jnp.float32), 1, cp)[0]
    be_p = _pad_rows_cols(beta.reshape(1, cout).astype(jnp.float32), 1, cp)[0]
    scale = g_p * jax.lax.rsqrt(var + bn_eps)
    shift = be_p - mean * scale
    params = jnp.zeros((8, cp), jnp.float32).at[0].set(scale).at[1].set(shift)
    # TODO(synk): PyTorch BatchNorm2d(train) also updates running_mean/var as a
    # forward side effect; not modeled here (normalization output parity only).

    # -------- call C: pure-VPU BN apply + ReLU over the stored conv rows ----
    act = pl.pallas_call(
        _bn_relu_kernel,
        out_shape=jax.ShapeDtypeStruct((r2p, cp), jnp.bfloat16),
        grid_spec=pltpu.PrefetchScalarGridSpec(
            num_scalar_prefetch=0,
            grid=(r2p // tile_a,),
            in_specs=[pl.BlockSpec((tile_a, cp), lambda i: (i, 0)),
                      pl.BlockSpec((8, cp), lambda i: (0, 0))],
            out_specs=pl.BlockSpec((tile_a, cp), lambda i: (i, 0))),
        compiler_params=pltpu.CompilerParams(
            dimension_semantics=("parallel",),
            vmem_limit_bytes=vmem_limit),
    )(conv_rows, params)

    # NHWC/bf16 is available as act[:r2, :cout].reshape(n, doh, dow, cout) for
    # consumers that can take it; produce NCHW f32 for module-output parity.
    up_img = act[:r2, :cout].astype(jnp.float32).reshape(n, doh, dow, cout)
    up_img = up_img.transpose(0, 3, 1, 2)
    up_mask = jnp.broadcast_to(umask_keep_flat.reshape(n, 1, doh, dow),
                               (n, cout, doh, dow)).astype(jnp.float32)
    return up_img, up_mask


# --------------------------- pure-JAX reference ---------------------------- #

def _reference_forward(img, mask_in, weight, bias, gamma, beta,
                       *, kernel_size, stride, padding, bn_eps=1e-5):
    dn = jax.lax.conv_dimension_numbers(img.shape, weight.shape,
                                        ("NCHW", "OIHW", "NCHW"))
    pad = [(padding, padding), (padding, padding)]
    cin, cout = img.shape[1], weight.shape[0]
    slide = float(cin * kernel_size * kernel_size)

    raw = jax.lax.conv_general_dilated(img * mask_in, weight, (stride, stride),
                                       pad, dimension_numbers=dn)
    ones_w = jnp.ones_like(weight)
    msum = jax.lax.conv_general_dilated(mask_in, ones_w, (stride, stride),
                                        pad, dimension_numbers=dn)
    ratio = slide / (msum + 1e-8)
    umask = jnp.clip(msum, 0.0, 1.0)
    ratio = ratio * umask
    bview = bias.reshape(1, cout, 1, 1)
    out = (raw * ratio + bview) * umask

    mean = out.mean(axis=(0, 2, 3), keepdims=True)
    var = out.var(axis=(0, 2, 3), keepdims=True)
    norm = (out - mean) / jnp.sqrt(var + bn_eps)
    norm = norm * gamma.reshape(1, cout, 1, 1) + beta.reshape(1, cout, 1, 1)
    act = jnp.maximum(norm, 0.0)

    oh, ow = act.shape[2], act.shape[3]
    return (act[:, :, 0:2 * (oh // 2):2, 0:2 * (ow // 2):2],
            umask[:, :, 0:2 * (oh // 2):2, 0:2 * (ow // 2):2])


# --------------------------------- main ------------------------------------ #

if __name__ == "__main__":
    N, Cin, H, W = 2, 4, 16, 16
    Cout, K, STRIDE = 8, 3, 2
    PAD = (K - 1) // 2

    key = jax.random.PRNGKey(0)
    k_img, k_mask, k_w, k_b = jax.random.split(key, 4)

    img = jax.random.normal(k_img, (N, Cin, H, W), dtype=jnp.float32)
    mask_in = (jax.random.uniform(k_mask, (N, Cin, H, W)) > 0.3).astype(jnp.float32)

    # PartialConv2d weights (Conv2d shapes), deterministic init.
    weight = 0.1 * jax.random.normal(k_w, (Cout, Cin, K, K), dtype=jnp.float32)
    bias = 0.1 * jax.random.normal(k_b, (Cout,), dtype=jnp.float32)
    # BatchNorm2d default init.
    gamma = jnp.ones((Cout,), dtype=jnp.float32)
    beta = jnp.zeros((Cout,), dtype=jnp.float32)

    fwd = jax.jit(functools.partial(pconv_encoder_forward,
                                    kernel_size=K, stride=STRIDE, padding=PAD))
    up_img, up_mask = fwd(img, mask_in, weight, bias, gamma, beta)
    jax.block_until_ready((up_img, up_mask))

    ref_img, ref_mask = _reference_forward(
        img, mask_in, weight, bias, gamma, beta,
        kernel_size=K, stride=STRIDE, padding=PAD)

    assert up_img.shape == (N, Cout, H // 4, W // 4), up_img.shape
    assert up_mask.shape == (N, Cout, H // 4, W // 4), up_mask.shape
    # Kernel uses bf16 MXU operands (f32 accumulation) and a bf16 final store;
    # compare against the pure-f32 reference with bf16-appropriate tolerance.
    assert jnp.allclose(up_img, ref_img, atol=5e-2, rtol=5e-2), \
        float(jnp.max(jnp.abs(up_img - ref_img)))
    assert jnp.allclose(up_mask, ref_mask, atol=1e-6, rtol=1e-6)

    print("KERNEL_OK")
</pallas_src>

<mosaic_0001>
module attributes {stable_mosaic.version = 11 : i64} {
  func.func @_pconv_stats_kernel(%arg0: i32, %arg1: i32, %arg2: memref<48x128xbf16, #tpu.memory_space<vmem>>, %arg3: memref<48x1xf32, #tpu.memory_space<vmem>>, %arg4: memref<48x1xf32, #tpu.memory_space<vmem>>, %arg5: memref<128x128xbf16, #tpu.memory_space<vmem>>, %arg6: memref<1x128xf32, #tpu.memory_space<vmem>>, %arg7: memref<8x128xf32, #tpu.memory_space<vmem>>, %arg8: memref<8x128xf32, #tpu.memory_space<vmem>>) attributes {dimension_semantics = [#tpu.dimension_semantics<parallel>, #tpu.dimension_semantics<arbitrary>], iteration_bounds = array<i64: 2, 1>, scalar_prefetch = 0 : i64, scratch_operands = 0 : i64, tpu.core_type = #tpu.core_type<tc>, window_params = [{transform_indices = @transform_0, window_bounds = array<i64: 48, 128>}, {transform_indices = @transform_1, window_bounds = array<i64: 48, 1>}, {transform_indices = @transform_2, window_bounds = array<i64: 48, 1>}, {pipeline_mode = #tpu.pipeline_mode<synchronous>, transform_indices = @transform_3, window_bounds = array<i64: 128, 128>}, {pipeline_mode = #tpu.pipeline_mode<synchronous>, transform_indices = @transform_4, window_bounds = array<i64: 1, 128>}, {transform_indices = @transform_5, window_bounds = array<i64: 8, 128>}, {transform_indices = @transform_6, window_bounds = array<i64: 8, 128>}]} {
    %c0_i32 = arith.constant 0 : i32
    %0 = arith.cmpi eq, %arg1, %c0_i32 : i32
    %1 = arith.extui %0 : i1 to i32
    %c0_i32_0 = arith.constant 0 : i32
    %2 = arith.cmpi ne, %1, %c0_i32_0 : i32
    scf.if %2 {
      %cst_20 = arith.constant 0.000000e+00 : f32
      %28 = vector.broadcast %cst_20 : f32 to vector<8x128xf32>
      %c0_21 = arith.constant 0 : index
      %c0_22 = arith.constant 0 : index
      %29 = vector.load %arg7[%c0_21, %c0_22] : memref<8x128xf32, #tpu.memory_space<vmem>>, vector<8x128xf32>
      tpu.vector_store %arg7[%c0_21, %c0_22], %28 {strides = array<i32>} : memref<8x128xf32, #tpu.memory_space<vmem>>, vector<8x128xf32>,
      %cst_23 = arith.constant 0.000000e+00 : f32
      %30 = vector.broadcast %cst_23 : f32 to vector<8x128xf32>
      %c0_24 = arith.constant 0 : index
      %c0_25 = arith.constant 0 : index
      %31 = vector.load %arg8[%c0_24, %c0_25] : memref<8x128xf32, #tpu.memory_space<vmem>>, vector<8x128xf32>
      tpu.vector_store %arg8[%c0_24, %c0_25], %30 {strides = array<i32>} : memref<8x128xf32, #tpu.memory_space<vmem>>, vector<8x128xf32>,
    } else {
    }
    %c0 = arith.constant 0 : index
    %c0_1 = arith.constant 0 : index
    %3 = vector.load %arg2[%c0, %c0_1] : memref<48x128xbf16, #tpu.memory_space<vmem>>, vector<48x128xbf16>
    %c0_2 = arith.constant 0 : index
    %c0_3 = arith.constant 0 : index
    %4 = vector.load %arg5[%c0_2, %c0_3] : memref<128x128xbf16, #tpu.memory_space<vmem>>, vector<128x128xbf16>
    %cst = arith.constant dense<0.000000e+00> : vector<48x128xf32>
    %5 = tpu.matmul %3, %4, %cst {dimension_numbers = #tpu.dot_dimension_numbers<[1], [0], [0], [1], [0, 0, 1, 1], [], []>} : vector<48x128xbf16>, vector<128x128xbf16>, vector<48x128xf32> -> vector<48x128xf32>
    %c0_4 = arith.constant 0 : index
    %c0_5 = arith.constant 0 : index
    %6 = vector.load %arg3[%c0_4, %c0_5] : memref<48x1xf32, #tpu.memory_space<vmem>>, vector<48x1xf32>
    %7 = vector.broadcast %6 : vector<48x1xf32> to vector<48x128xf32>
    %8 = arith.mulf %5, %7 : vector<48x128xf32>
    %c0_6 = arith.constant 0 : index
    %c0_7 = arith.constant 0 : index
    %9 = vector.load %arg6[%c0_6, %c0_7] : memref<1x128xf32, #tpu.memory_space<vmem>>, vector<1x128xf32>
    %10 = vector.broadcast %9 : vector<1x128xf32> to vector<48x128xf32>
    %11 = arith.addf %8, %10 : vector<48x128xf32>
    %c0_8 = arith.constant 0 : index
    %c0_9 = arith.constant 0 : index
    %12 = vector.load %arg4[%c0_8, %c0_9] : memref<48x1xf32, #tpu.memory_space<vmem>>, vector<48x1xf32>
    %13 = vector.broadcast %12 : vector<48x1xf32> to vector<48x128xf32>
    %14 = arith.mulf %11, %13 : vector<48x128xf32>
    %c0_10 = arith.constant 0 : index
    %c0_11 = arith.constant 0 : index
    %15 = vector.load %arg7[%c0_10, %c0_11] : memref<8x128xf32, #tpu.memory_space<vmem>>, vector<8x128xf32>
    %cst_12 = arith.constant dense<0.000000e+00> : vector<128xf32>
    %16 = vector.multi_reduction <add>, %14, %cst_12 [0] : vector<48x128xf32> to vector<128xf32>
    %17 = vector.shape_cast %16 : vector<128xf32> to vector<1x128xf32>
    %18 = vector.broadcast %17 : vector<1x128xf32> to vector<8x128xf32>
    %19 = arith.addf %15, %18 : vector<8x128xf32>
    %c0_13 = arith.constant 0 : index
    %c0_14 = arith.constant 0 : index
    %20 = vector.load %arg7[%c0_13, %c0_14] : memref<8x128xf32, #tpu.memory_space<vmem>>, vector<8x128xf32>
    tpu.vector_store %arg7[%c0_13, %c0_14], %19 {strides = array<i32>} : memref<8x128xf32, #tpu.memory_space<vmem>>, vector<8x128xf32>,
    %c0_15 = arith.constant 0 : index
    %c0_16 = arith.constant 0 : index
    %21 = vector.load %arg8[%c0_15, %c0_16] : memref<8x128xf32, #tpu.memory_space<vmem>>, vector<8x128xf32>
    %22 = arith.mulf %14, %14 : vector<48x128xf32>
    %cst_17 = arith.constant dense<0.000000e+00> : vector<128xf32>
    %23 = vector.multi_reduction <add>, %22, %cst_17 [0] : vector<48x128xf32> to vector<128xf32>
    %24 = vector.shape_cast %23 : vector<128xf32> to vector<1x128xf32>
    %25 = vector.broadcast %24 : vector<1x128xf32> to vector<8x128xf32>
    %26 = arith.addf %21, %25 : vector<8x128xf32>
    %c0_18 = arith.constant 0 : index
    %c0_19 = arith.constant 0 : index
    %27 = vector.load %arg8[%c0_18, %c0_19] : memref<8x128xf32, #tpu.memory_space<vmem>>, vector<8x128xf32>
    tpu.vector_store %arg8[%c0_18, %c0_19], %26 {strides = array<i32>} : memref<8x128xf32, #tpu.memory_space<vmem>>, vector<8x128xf32>,
    return
  }
  func.func @transform_0(%arg0: i32, %arg1: i32) -> (i32, i32) {
    %c1_i32 = arith.constant 1 : i32
    %0 = arith.muli %arg0, %c1_i32 : i32
    %1 = arith.addi %0, %arg1 : i32
    %c0_i32 = arith.constant 0 : i32
    %c0_i32_0 = arith.constant 0 : i32
    return %1, %c0_i32 : i32, i32
  }
  func.func @transform_1(%arg0: i32, %arg1: i32) -> (i32, i32) {
    %c1_i32 = arith.constant 1 : i32
    %0 = arith.muli %arg0, %c1_i32 : i32
    %1 = arith.addi %0, %arg1 : i32
    %c0_i32 = arith.constant 0 : i32
    %c0_i32_0 = arith.constant 0 : i32
    return %1, %c0_i32 : i32, i32
  }
  func.func @transform_2(%arg0: i32, %arg1: i32) -> (i32, i32) {
    %c1_i32 = arith.constant 1 : i32
    %0 = arith.muli %arg0, %c1_i32 : i32
    %1 = arith.addi %0, %arg1 : i32
    %c0_i32 = arith.constant 0 : i32
    %c0_i32_0 = arith.constant 0 : i32
    return %1, %c0_i32 : i32, i32
  }
  func.func @transform_3(%arg0: i32, %arg1: i32) -> (i32, i32) {
    %c0_i32 = arith.constant 0 : i32
    %c0_i32_0 = arith.constant 0 : i32
    %c0_i32_1 = arith.constant 0 : i32
    return %c0_i32, %c0_i32_0 : i32, i32
  }
  func.func @transform_4(%arg0: i32, %arg1: i32) -> (i32, i32) {
    %c0_i32 = arith.constant 0 : i32
    %c0_i32_0 = arith.constant 0 : i32
    %c0_i32_1 = arith.constant 0 : i32
    return %c0_i32, %c0_i32_0 : i32, i32
  }
  func.func @transform_5(%arg0: i32, %arg1: i32) -> (i32, i32) {
    %c0_i32 = arith.constant 0 : i32
    %c0_i32_0 = arith.constant 0 : i32
    return %arg0, %c0_i32 : i32, i32
  }
  func.func @transform_6(%arg0: i32, %arg1: i32) -> (i32, i32) {
    %c0_i32 = arith.constant 0 : i32
    %c0_i32_0 = arith.constant 0 : i32
    return %arg0, %c0_i32 : i32, i32
  }
}

module attributes {stable_mosaic.version = 11 : i64} {
  func.func @_pconv_keep_kernel(%arg0: i32, %arg1: i32, %arg2: memref<16x128xbf16, #tpu.memory_space<vmem>>, %arg3: memref<16x1xf32, #tpu.memory_space<vmem>>, %arg4: memref<16x1xf32, #tpu.memory_space<vmem>>, %arg5: memref<128x128xbf16, #tpu.memory_space<vmem>>, %arg6: memref<1x128xf32, #tpu.memory_space<vmem>>, %arg7: memref<16x128xf32, #tpu.memory_space<vmem>>, %arg8: memref<8x128xf32, #tpu.memory_space<vmem>>, %arg9: memref<8x128xf32, #tpu.memory_space<vmem>>) attributes {dimension_semantics = [#tpu.dimension_semantics<parallel>, #tpu.dimension_semantics<arbitrary>], iteration_bounds = array<i64: 2, 1>, scalar_prefetch = 0 : i64, scratch_operands = 0 : i64, tpu.core_type = #tpu.core_type<tc>, window_params = [{transform_indices = @transform_0, window_bounds = array<i64: 16, 128>}, {transform_indices = @transform_1, window_bounds = array<i64: 16, 1>}, {transform_indices = @transform_2, window_bounds = array<i64: 16, 1>}, {pipeline_mode = #tpu.pipeline_mode<synchronous>, transform_indices = @transform_3, window_bounds = array<i64: 128, 128>}, {pipeline_mode = #tpu.pipeline_mode<synchronous>, transform_indices = @transform_4, window_bounds = array<i64: 1, 128>}, {transform_indices = @transform_5, window_bounds = array<i64: 16, 128>}, {transform_indices = @transform_6, window_bounds = array<i64: 8, 128>}, {transform_indices = @transform_7, window_bounds = array<i64: 8, 128>}]} {
    %c0_i32 = arith.constant 0 : i32
    %0 = arith.cmpi eq, %arg1, %c0_i32 : i32
    %1 = arith.extui %0 : i1 to i32
    %c0_i32_0 = arith.constant 0 : i32
    %2 = arith.cmpi ne, %1, %c0_i32_0 : i32
    scf.if %2 {
      %cst_22 = arith.constant 0.000000e+00 : f32
      %29 = vector.broadcast %cst_22 : f32 to vector<8x128xf32>
      %c0_23 = arith.constant 0 : index
      %c0_24 = arith.constant 0 : index
      %30 = vector.load %arg8[%c0_23, %c0_24] : memref<8x128xf32, #tpu.memory_space<vmem>>, vector<8x128xf32>
      tpu.vector_store %arg8[%c0_23, %c0_24], %29 {strides = array<i32>} : memref<8x128xf32, #tpu.memory_space<vmem>>, vector<8x128xf32>,
      %cst_25 = arith.constant 0.000000e+00 : f32
      %31 = vector.broadcast %cst_25 : f32 to vector<8x128xf32>
      %c0_26 = arith.constant 0 : index
      %c0_27 = arith.constant 0 : index
      %32 = vector.load %arg9[%c0_26, %c0_27] : memref<8x128xf32, #tpu.memory_space<vmem>>, vector<8x128xf32>
      tpu.vector_store %arg9[%c0_26, %c0_27], %31 {strides = array<i32>} : memref<8x128xf32, #tpu.memory_space<vmem>>, vector<8x128xf32>,
    } else {
    }
    %c0 = arith.constant 0 : index
    %c0_1 = arith.constant 0 : index
    %3 = vector.load %arg2[%c0, %c0_1] : memref<16x128xbf16, #tpu.memory_space<vmem>>, vector<16x128xbf16>
    %c0_2 = arith.constant 0 : index
    %c0_3 = arith.constant 0 : index
    %4 = vector.load %arg5[%c0_2, %c0_3] : memref<128x128xbf16, #tpu.memory_space<vmem>>, vector<128x128xbf16>
    %cst = arith.constant dense<0.000000e+00> : vector<16x128xf32>
    %5 = tpu.matmul %3, %4, %cst {dimension_numbers = #tpu.dot_dimension_numbers<[1], [0], [0], [1], [0, 0, 1, 1], [], []>} : vector<16x128xbf16>, vector<128x128xbf16>, vector<16x128xf32> -> vector<16x128xf32>
    %c0_4 = arith.constant 0 : index
    %c0_5 = arith.constant 0 : index
    %6 = vector.load %arg3[%c0_4, %c0_5] : memref<16x1xf32, #tpu.memory_space<vmem>>, vector<16x1xf32>
    %7 = vector.broadcast %6 : vector<16x1xf32> to vector<16x128xf32>
    %8 = arith.mulf %5, %7 : vector<16x128xf32>
    %c0_6 = arith.constant 0 : index
    %c0_7 = arith.constant 0 : index
    %9 = vector.load %arg6[%c0_6, %c0_7] : memref<1x128xf32, #tpu.memory_space<vmem>>, vector<1x128xf32>
    %10 = vector.broadcast %9 : vector<1x128xf32> to vector<16x128xf32>
    %11 = arith.addf %8, %10 : vector<16x128xf32>
    %c0_8 = arith.constant 0 : index
    %c0_9 = arith.constant 0 : index
    %12 = vector.load %arg4[%c0_8, %c0_9] : memref<16x1xf32, #tpu.memory_space<vmem>>, vector<16x1xf32>
    %13 = vector.broadcast %12 : vector<16x1xf32> to vector<16x128xf32>
    %14 = arith.mulf %11, %13 : vector<16x128xf32>
    %c0_10 = arith.constant 0 : index
    %c0_11 = arith.constant 0 : index
    %15 = vector.load %arg7[%c0_10, %c0_11] : memref<16x128xf32, #tpu.memory_space<vmem>>, vector<16x128xf32>
    tpu.vector_store %arg7[%c0_10, %c0_11], %14 {strides = array<i32>} : memref<16x128xf32, #tpu.memory_space<vmem>>, vector<16x128xf32>,
    %c0_12 = arith.constant 0 : index
    %c0_13 = arith.constant 0 : index
    %16 = vector.load %arg8[%c0_12, %c0_13] : memref<8x128xf32, #tpu.memory_space<vmem>>, vector<8x128xf32>
    %cst_14 = arith.constant dense<0.000000e+00> : vector<128xf32>
    %17 = vector.multi_reduction <add>, %14, %cst_14 [0] : vector<16x128xf32> to vector<128xf32>
    %18 = vector.shape_cast %17 : vector<128xf32> to vector<1x128xf32>
    %19 = vector.broadcast %18 : vector<1x128xf32> to vector<8x128xf32>
    %20 = arith.addf %16, %19 : vector<8x128xf32>
    %c0_15 = arith.constant 0 : index
    %c0_16 = arith.constant 0 : index
    %21 = vector.load %arg8[%c0_15, %c0_16] : memref<8x128xf32, #tpu.memory_space<vmem>>, vector<8x128xf32>
    tpu.vector_store %arg8[%c0_15, %c0_16], %20 {strides = array<i32>} : memref<8x128xf32, #tpu.memory_space<vmem>>, vector<8x128xf32>,
    %c0_17 = arith.constant 0 : index
    %c0_18 = arith.constant 0 : index
    %22 = vector.load %arg9[%c0_17, %c0_18] : memref<8x128xf32, #tpu.memory_space<vmem>>, vector<8x128xf32>
    %23 = arith.mulf %14, %14 : vector<16x128xf32>
    %cst_19 = arith.constant dense<0.000000e+00> : vector<128xf32>
    %24 = vector.multi_reduction <add>, %23, %cst_19 [0] : vector<16x128xf32> to vector<128xf32>
    %25 = vector.shape_cast %24 : vector<128xf32> to vector<1x128xf32>
    %26 = vector.broadcast %25 : vector<1x128xf32> to vector<8x128xf32>
    %27 = arith.addf %22, %26 : vector<8x128xf32>
    %c0_20 = arith.constant 0 : index
    %c0_21 = arith.constant 0 : index
    %28 = vector.load %arg9[%c0_20, %c0_21] : memref<8x128xf32, #tpu.memory_space<vmem>>, vector<8x128xf32>
    tpu.vector_store %arg9[%c0_20, %c0_21], %27 {strides = array<i32>} : memref<8x128xf32, #tpu.memory_space<vmem>>, vector<8x128xf32>,
    return
  }
  func.func @transform_0(%arg0: i32, %arg1: i32) -> (i32, i32) {
    %c1_i32 = arith.constant 1 : i32
    %0 = arith.muli %arg0, %c1_i32 : i32
    %1 = arith.addi %0, %arg1 : i32
    %c0_i32 = arith.constant 0 : i32
    %c0_i32_0 = arith.constant 0 : i32
    return %1, %c0_i32 : i32, i32
  }
  func.func @transform_1(%arg0: i32, %arg1: i32) -> (i32, i32) {
    %c1_i32 = arith.constant 1 : i32
    %0 = arith.muli %arg0, %c1_i32 : i32
    %1 = arith.addi %0, %arg1 : i32
    %c0_i32 = arith.constant 0 : i32
    %c0_i32_0 = arith.constant 0 : i32
    return %1, %c0_i32 : i32, i32
  }
  func.func @transform_2(%arg0: i32, %arg1: i32) -> (i32, i32) {
    %c1_i32 = arith.constant 1 : i32
    %0 = arith.muli %arg0, %c1_i32 : i32
    %1 = arith.addi %0, %arg1 : i32
    %c0_i32 = arith.constant 0 : i32
    %c0_i32_0 = arith.constant 0 : i32
    return %1, %c0_i32 : i32, i32
  }
  func.func @transform_3(%arg0: i32, %arg1: i32) -> (i32, i32) {
    %c0_i32 = arith.constant 0 : i32
    %c0_i32_0 = arith.constant 0 : i32
    %c0_i32_1 = arith.constant 0 : i32
    return %c0_i32, %c0_i32_0 : i32, i32
  }
  func.func @transform_4(%arg0: i32, %arg1: i32) -> (i32, i32) {
    %c0_i32 = arith.constant 0 : i32
    %c0_i32_0 = arith.constant 0 : i32
    %c0_i32_1 = arith.constant 0 : i32
    return %c0_i32, %c0_i32_0 : i32, i32
  }
  func.func @transform_5(%arg0: i32, %arg1: i32) -> (i32, i32) {
    %c1_i32 = arith.constant 1 : i32
    %0 = arith.muli %arg0, %c1_i32 : i32
    %1 = arith.addi %0, %arg1 : i32
    %c0_i32 = arith.constant 0 : i32
    %c0_i32_0 = arith.constant 0 : i32
    return %1, %c0_i32 : i32, i32
  }
  func.func @transform_6(%arg0: i32, %arg1: i32) -> (i32, i32) {
    %c0_i32 = arith.constant 0 : i32
    %c0_i32_0 = arith.constant 0 : i32
    return %arg0, %c0_i32 : i32, i32
  }
  func.func @transform_7(%arg0: i32, %arg1: i32) -> (i32, i32) {
    %c0_i32 = arith.constant 0 : i32
    %c0_i32_0 = arith.constant 0 : i32
    return %arg0, %c0_i32 : i32, i32
  }
}

module attributes {stable_mosaic.version = 11 : i64} {
  func.func @_bn_relu_kernel(%arg0: i32, %arg1: memref<16x128xf32, #tpu.memory_space<vmem>>, %arg2: memref<8x128xf32, #tpu.memory_space<vmem>>, %arg3: memref<16x128xbf16, #tpu.memory_space<vmem>>) attributes {dimension_semantics = [#tpu.dimension_semantics<parallel>], iteration_bounds = array<i64: 2>, scalar_prefetch = 0 : i64, scratch_operands = 0 : i64, tpu.core_type = #tpu.core_type<tc>, window_params = [{transform_indices = @transform_0, window_bounds = array<i64: 16, 128>}, {pipeline_mode = #tpu.pipeline_mode<synchronous>, transform_indices = @transform_1, window_bounds = array<i64: 8, 128>}, {transform_indices = @transform_2, window_bounds = array<i64: 16, 128>}]} {
    %c0 = arith.constant 0 : index
    %c0_0 = arith.constant 0 : index
    %0 = vector.load %arg1[%c0, %c0_0] : memref<16x128xf32, #tpu.memory_space<vmem>>, vector<16x128xf32>
    %c0_1 = arith.constant 0 : index
    %c0_2 = arith.constant 0 : index
    %1 = vector.load %arg2[%c0_1, %c0_2] : memref<8x128xf32, #tpu.memory_space<vmem>>, vector<1x128xf32>
    %2 = vector.broadcast %1 : vector<1x128xf32> to vector<16x128xf32>
    %3 = arith.mulf %0, %2 : vector<16x128xf32>
    %c1 = arith.constant 1 : index
    %c0_3 = arith.constant 0 : index
    %4 = vector.load %arg2[%c1, %c0_3] : memref<8x128xf32, #tpu.memory_space<vmem>>, vector<1x128xf32>
    %5 = vector.broadcast %4 : vector<1x128xf32> to vector<16x128xf32>
    %6 = arith.addf %3, %5 : vector<16x128xf32>
    %cst = arith.constant 0.000000e+00 : f32
    %7 = vector.broadcast %cst : f32 to vector<16x128xf32>
    %8 = arith.maximumf %6, %7 : vector<16x128xf32>
    %9 = arith.truncf %8 : vector<16x128xf32> to vector<16x128xbf16>
    %c0_4 = arith.constant 0 : index
    %c0_5 = arith.constant 0 : index
    %10 = vector.load %arg3[%c0_4, %c0_5] : memref<16x128xbf16, #tpu.memory_space<vmem>>, vector<16x128xbf16>
    tpu.vector_store %arg3[%c0_4, %c0_5], %9 {strides = array<i32>} : memref<16x128xbf16, #tpu.memory_space<vmem>>, vector<16x128xbf16>,
    return
  }
  func.func @transform_0(%arg0: i32) -> (i32, i32) {
    %c0_i32 = arith.constant 0 : i32
    %c0_i32_0 = arith.constant 0 : i32
    return %arg0, %c0_i32 : i32, i32
  }
  func.func @transform_1(%arg0: i32) -> (i32, i32) {
    %c0_i32 = arith.constant 0 : i32
    %c0_i32_0 = arith.constant 0 : i32
    %c0_i32_1 = arith.constant 0 : i32
    return %c0_i32, %c0_i32_0 : i32, i32
  }
  func.func @transform_2(%arg0: i32) -> (i32, i32) {
    %c0_i32 = arith.constant 0 : i32
    %c0_i32_0 = arith.constant 0 : i32
    return %arg0, %c0_i32 : i32, i32
  }
}

</mosaic_0001>

<llo_original>
// kernel: pconv_encoder_forward.4
$region0: #{pconv_encoder_forward.4}
  #allocation0 [shape = 'u32[]', space=smem, size = 0x4, offset = 0x4, fixed_abs, tag = 'smem constant byte address 0x4 - core index']
  #allocation1 [shape = 'u32[72,128]{1,0:T(1,128)}', space=vmem, size = 0x9000, scoped, tag = 'internal scratch']
  %s0 = inlined_call_operand.vmem [shape: bf16[96,128], index: 0, kind: input, shape index: {}]
  %s1 = inlined_call_operand.vmem [shape: f32[96,1], index: 1, kind: input, shape index: {}]
  %s2 = inlined_call_operand.vmem [shape: f32[96,1], index: 2, kind: input, shape index: {}]
  %s3 = inlined_call_operand.vmem [shape: bf16[128,128], index: 3, kind: input, shape index: {}]
  %s4 = inlined_call_operand.vmem [shape: f32[1,128], index: 4, kind: input, shape index: {}]
  %s5 = inlined_call_operand.vmem [shape: f32[16,128], index: 5, kind: output, shape index: {0}]
  %s6 = inlined_call_operand.vmem [shape: f32[16,128], index: 6, kind: output, shape index: {1}]
  %7 = xla_tuple %s5, %s6
  %s8 = sld [smem:[#allocation0]]
  $region65: #{pconv_encoder_forward.4} parent=0
    _
  %s10 = ssub.s32 1, %s8
  %s11 = scalar_select 0, %s10, %s8
  loop: start=0, step=1, limit=4
  $region2: #{pconv_encoder_forward.4} parent=0 // loop_pre_header
    _
  $region3: #{pconv_encoder_forward.4} parent=0 // loop_header
    %s13 = sphi 0, %s17
    %p14 = scmp.ge.s32.totalorder %s13, 4
    %s20 = sphi 0, %s32
    %s21 = sphi 0, %s28
    %s22 = sphi 0, %s20
    %s23 = sphi 0, %s21
    %s24 = sphi 0, %s22
    %s25 = sphi 0, %s23
    %s37 = sphi 0, %s39
    %s40 = sphi 0, %s37
    %s41 = sphi 0, %s40
    %s57 = sphi 0, %s41
    %s65 = sphi 0, %s67
    %s68 = sphi 0, %s65
    %s69 = sphi 0, %s68
    %s85 = sphi 0, %s69
    %s93 = sphi 0, %s95
    %s96 = sphi 0, %s93
    %s97 = sphi 0, %s96
    %s113 = sphi 0, %s97
    %s117 = sphi 0, %s117
    %s119 = sphi 0, %s117
    %s120 = sphi 0, %s119
    %s134 = sphi 0, %s120
    %s138 = sphi 0, %s138
    %s140 = sphi 0, %s138
    %s141 = sphi 0, %s140
    %s155 = sphi 0, %s141
    %s161 = sphi 0, %s163
    %s164 = sphi 0, %s161
    %s165 = sphi 0, %s164
    %s181 = sphi 0, %s165
    %s187 = sphi 0, %s189
    %s190 = sphi 0, %s187
    %s191 = sphi 0, %s190
    %s207 = sphi 0, %s191
  $region4: #{pconv_encoder_forward.4} parent=0 // loop_header_branch
    %16 = sbr.rel (%p14) target = $region8
  $region5: #{pconv_encoder_forward.4} parent=0 // loop_body
    %s18 = ssub.s32 %s13, 1
    %s19 = ssub.s32 %s13, 2
    %s26 = sadd.s32 1, %s21
    %p27 = scmp.ge.s32.totalorder %s26, 1
    %s28 = scalar_select %p27, 0, %s26
    %s29 = sadd.s32 1, %s20
    %s30 = scalar_select %p27, %s29, %s20
    %p31 = scmp.ge.s32.totalorder %s30, 2
    %s32 = scalar_select %p31, 0, %s30
    %s33 = sadd.s32 %s20, %s21
    %s34 = sadd.s32 %s32, %s28
    %s35 = ssub.s32 %s33, %s34
    %p36 = scmp.eq.s32.totalorder %s35, 0
    %s38 = sadd.s32 %s37, 1
    %s39 = scalar_select %p36, %s37, %s38
    %p42 = pneg %p36
    %p43 = scmp.eq.s32.totalorder %s13, 1
    %p44 = por %p42, %p43
    %p45 = scmp.ne.s32.totalorder %s37, %s40
    %p46 = scmp.eq.s32.totalorder %s13, 0
    %p47 = por %p45, %p46
    %p48 = scmp.ne.s32.totalorder %s37, %s40
    %p49 = scmp.eq.s32.totalorder %s18, 1
    %p50 = por %p48, %p49
    %p51 = scmp.ne.s32.totalorder %s40, %s41
    %p52 = scmp.eq.s32.totalorder %s18, 0
    %p53 = por %p51, %p52
    %p54 = scmp.ne.s32.totalorder %s40, %s41
    %p55 = scmp.eq.s32.totalorder %s19, 1
    %p56 = por %p54, %p55
    %p58 = scmp.ne.s32.totalorder %s41, %s57
    %p59 = scmp.eq.s32.totalorder %s19, 0
    %p60 = por %p58, %p59
    %s61 = sadd.s32 %s20, %s21
    %s62 = sadd.s32 %s32, %s28
    %s63 = ssub.s32 %s61, %s62
    %p64 = scmp.eq.s32.totalorder %s63, 0
    %s66 = sadd.s32 %s65, 1
    %s67 = scalar_select %p64, %s65, %s66
    %p70 = pneg %p64
    %p71 = scmp.eq.s32.totalorder %s13, 1
    %p72 = por %p70, %p71
    %p73 = scmp.ne.s32.totalorder %s65, %s68
    %p74 = scmp.eq.s32.totalorder %s13, 0
    %p75 = por %p73, %p74
    %p76 = scmp.ne.s32.totalorder %s65, %s68
    %p77 = scmp.eq.s32.totalorder %s18, 1
    %p78 = por %p76, %p77
    %p79 = scmp.ne.s32.totalorder %s68, %s69
    %p80 = scmp.eq.s32.totalorder %s18, 0
    %p81 = por %p79, %p80
    %p82 = scmp.ne.s32.totalorder %s68, %s69
    %p83 = scmp.eq.s32.totalorder %s19, 1
    %p84 = por %p82, %p83
    %p86 = scmp.ne.s32.totalorder %s69, %s85
    %p87 = scmp.eq.s32.totalorder %s19, 0
    %p88 = por %p86, %p87
    %s89 = sadd.s32 %s20, %s21
    %s90 = sadd.s32 %s32, %s28
    %s91 = ssub.s32 %s89, %s90
    %p92 = scmp.eq.s32.totalorder %s91, 0
    %s94 = sadd.s32 %s93, 1
    %s95 = scalar_select %p92, %s93, %s94
    %p98 = pneg %p92
    %p99 = scmp.eq.s32.totalorder %s13, 1
    %p100 = por %p98, %p99
    %p101 = scmp.ne.s32.totalorder %s93, %s96
    %p102 = scmp.eq.s32.totalorder %s13, 0
    %p103 = por %p101, %p102
    %p104 = scmp.ne.s32.totalorder %s93, %s96
    %p105 = scmp.eq.s32.totalorder %s18, 1
    %p106 = por %p104, %p105
    %p107 = scmp.ne.s32.totalorder %s96, %s97
    %p108 = scmp.eq.s32.totalorder %s18, 0
    %p109 = por %p107, %p108
    %p110 = scmp.ne.s32.totalorder %s96, %s97
    %p111 = scmp.eq.s32.totalorder %s19, 1
    %p112 = por %p110, %p111
    %p114 = scmp.ne.s32.totalorder %s97, %s113
    %p115 = scmp.eq.s32.totalorder %s19, 0
    %p116 = por %p114, %p115
    %s118 = sadd.s32 %s117, 1
    %p121 = scmp.eq.s32.totalorder %s13, 1
    %p122 = scmp.ne.s32.totalorder %s117, %s119
    %p123 = scmp.eq.s32.totalorder %s13, 0
    %p124 = por %p122, %p123
    %p125 = scmp.ne.s32.totalorder %s117, %s119
    %p126 = scmp.eq.s32.totalorder %s18, 1
    %p127 = por %p125, %p126
    %p128 = scmp.ne.s32.totalorder %s119, %s120
    %p129 = scmp.eq.s32.totalorder %s18, 0
    %p130 = por %p128, %p129
    %p131 = scmp.ne.s32.totalorder %s119, %s120
    %p132 = scmp.eq.s32.totalorder %s19, 1
    %p133 = por %p131, %p132
    %p135 = scmp.ne.s32.totalorder %s120, %s134
    %p136 = scmp.eq.s32.totalorder %s19, 0
    %p137 = por %p135, %p136
    %s139 = sadd.s32 %s138, 1
    %p142 = scmp.eq.s32.totalorder %s13, 1
    %p143 = scmp.ne.s32.totalorder %s138, %s140
    %p144 = scmp.eq.s32.totalorder %s13, 0
    %p145 = por %p143, %p144
    %p146 = scmp.ne.s32.totalorder %s138, %s140
    %p147 = scmp.eq.s32.totalorder %s18, 1
    %p148 = por %p146, %p147
    %p149 = scmp.ne.s32.totalorder %s140, %s141
    %p150 = scmp.eq.s32.totalorder %s18, 0
    %p151 = por %p149, %p150
    %p152 = scmp.ne.s32.totalorder %s140, %s141
    %p153 = scmp.eq.s32.totalorder %s19, 1
    %p154 = por %p152, %p153
    %p156 = scmp.ne.s32.totalorder %s141, %s155
    %p157 = scmp.eq.s32.totalorder %s19, 0
    %p158 = por %p156, %p157
    %s159 = ssub.s32 %s20, %s32
    %p160 = scmp.eq.s32.totalorder %s159, 0
    %s162 = sadd.s32 %s161, 1
    %s163 = scalar_select %p160, %s161, %s162
    %p166 = pneg %p160
    %p167 = scmp.eq.s32.totalorder %s13, 1
    %p168 = por %p166, %p167
    %p169 = scmp.ne.s32.totalorder %s161, %s164
    %p170 = scmp.eq.s32.totalorder %s13, 0
    %p171 = por %p169, %p170
    %p172 = scmp.ne.s32.totalorder %s161, %s164
    %p173 = scmp.eq.s32.totalorder %s18, 1
    %p174 = por %p172, %p173
    %p175 = scmp.ne.s32.totalorder %s164, %s165
    %p176 = scmp.eq.s32.totalorder %s18, 0
    %p177 = por %p175, %p176
    %p178 = scmp.ne.s32.totalorder %s164, %s165
    %p179 = scmp.eq.s32.totalorder %s19, 1
    %p180 = por %p178, %p179
    %p182 = scmp.ne.s32.totalorder %s165, %s181
    %p183 = scmp.eq.s32.totalorder %s19, 0
    %p184 = por %p182, %p183
    %s185 = ssub.s32 %s20, %s32
    %p186 = scmp.eq.s32.totalorder %s185, 0
    %s188 = sadd.s32 %s187, 1
    %s189 = scalar_select %p186, %s187, %s188
    %p192 = pneg %p186
    %p193 = scmp.eq.s32.totalorder %s13, 1
    %p194 = por %p192, %p193
    %p195 = scmp.ne.s32.totalorder %s187, %s190
    %p196 = scmp.eq.s32.totalorder %s13, 0
    %p197 = por %p195, %p196
    %p198 = scmp.ne.s32.totalorder %s187, %s190
    %p199 = scmp.eq.s32.totalorder %s18, 1
    %p200 = por %p198, %p199
    %p201 = scmp.ne.s32.totalorder %s190, %s191
    %p202 = scmp.eq.s32.totalorder %s18, 0
    %p203 = por %p201, %p202
    %p204 = scmp.ne.s32.totalorder %s190, %s191
    %p205 = scmp.eq.s32.totalorder %s19, 1
    %p206 = por %p204, %p205
    %p208 = scmp.ne.s32.totalorder %s191, %s207
    %p209 = scmp.eq.s32.totalorder %s19, 0
    %p210 = por %p208, %p209
    %p211 = scmp.le.s32.totalorder 1, %s13
    %p212 = scmp.lt.s32.totalorder %s13, 3
    %p213 = pnand %p211, %p212
    %p214 = pneg %p213
    // Predicated region
    $region9: #{pconv_encoder_forward.4} parent=5 // pred_check
      _
    $region10: #{pconv_encoder_forward.4} parent=5 // pred_check_branch
      %216 = sbr.rel (%p213) target = $region12
    $region11: #{pconv_encoder_forward.4} parent=5 // pred_region
      %s217 = ssub.s32 %s13, 1
      // Predicated region
      $region13: #{pconv_encoder_forward.4} parent=11 // pred_check
        %p218 = pneg %p130
      $region14: #{pconv_encoder_forward.4} parent=11 // pred_check_branch
        %220 = sbr.rel (%p218) target = $region16
      $region15: #{pconv_encoder_forward.4} parent=11 // pred_region
        _
      $region16: #{pconv_encoder_forward.4} parent=11 // pred_fallthru
        _
      // Predicated region
      $region17: #{pconv_encoder_forward.4} parent=11 // pred_check
        %p221 = pneg %p151
      $region18: #{pconv_encoder_forward.4} parent=11 // pred_check_branch
        %223 = sbr.rel (%p221) target = $region20
      $region19: #{pconv_encoder_forward.4} parent=11 // pred_region
        _
      $region20: #{pconv_encoder_forward.4} parent=11 // pred_fallthru
        _
    $region12: #{pconv_encoder_forward.4} parent=5 // pred_fallthru
      _
    %p224 = scmp.lt.s32.totalorder %s13, 2
    // Predicated region
    $region21: #{pconv_encoder_forward.4} parent=5 // pred_check
      %p225 = pneg %p224
    $region22: #{pconv_encoder_forward.4} parent=5 // pred_check_branch
      %227 = sbr.rel (%p225) target = $region24
    $region23: #{pconv_encoder_forward.4} parent=5 // pred_region
      // Predicated region
      $region25: #{pconv_encoder_forward.4} parent=23 // pred_check
        %p228 = pneg %p47
      $region26: #{pconv_encoder_forward.4} parent=23 // pred_check_branch
        %230 = sbr.rel (%p228) target = $region28
      $region27: #{pconv_encoder_forward.4} parent=23 // pred_region
        %s231 = sadd.s32 %s20, %s21
        %s232 = smul.u32 6, %s231
        %p233 = scmp.lt.s32.totalorder %s232, 11
        %s234 = scalar_select %p233, %s232, 11
        %s235 = smul.addr %s234, 4
        %s236 = scalar_lea.vmem %s0, %s235
        %s237 = sadd.s32 %s20, %s21
        %s238 = smul.u32 6, %s237
      $region28: #{pconv_encoder_forward.4} parent=23 // pred_fallthru
        _
      // Predicated region
      $region29: #{pconv_encoder_forward.4} parent=23 // pred_check
        %p239 = pneg %p75
      $region30: #{pconv_encoder_forward.4} parent=23 // pred_check_branch
        %241 = sbr.rel (%p239) target = $region32
      $region31: #{pconv_encoder_forward.4} parent=23 // pred_region
        %s242 = sadd.s32 %s20, %s21
        %s243 = smul.u32 6, %s242
        %p244 = scmp.lt.s32.totalorder %s243, 11
        %s245 = scalar_select %p244, %s243, 11
        %s246 = smul.addr %s245, 8
        %s247 = scalar_lea.vmem %s1, %s246
        %s248 = sadd.s32 %s20, %s21
        %s249 = smul.u32 6, %s248
      $region32: #{pconv_encoder_forward.4} parent=23 // pred_fallthru
        _
      // Predicated region
      $region33: #{pconv_encoder_forward.4} parent=23 // pred_check
        %p250 = pneg %p103
      $region34: #{pconv_encoder_forward.4} parent=23 // pred_check_branch
        %252 = sbr.rel (%p250) target = $region36
      $region35: #{pconv_encoder_forward.4} parent=23 // pred_region
        %s253 = sadd.s32 %s20, %s21
        %s254 = smul.u32 6, %s253
        %p255 = scmp.lt.s32.totalorder %s254, 11
        %s256 = scalar_select %p255, %s254, 11
        %s257 = smul.addr %s256, 8
        %s258 = scalar_lea.vmem %s2, %s257
        %s259 = sadd.s32 %s20, %s21
        %s260 = smul.u32 6, %s259
      $region36: #{pconv_encoder_forward.4} parent=23 // pred_fallthru
        _
    $region24: #{pconv_encoder_forward.4} parent=5 // pred_fallthru
      _
    %p261 = scmp.le.s32.totalorder 1, %s13
    %p262 = scmp.lt.s32.totalorder %s13, 3
    %p263 = pnand %p261, %p262
    %p264 = pneg %p263
    // Predicated region
    $region37: #{pconv_encoder_forward.4} parent=5 // pred_check
      _
    $region38: #{pconv_encoder_forward.4} parent=5 // pred_check_branch
      %266 = sbr.rel (%p263) target = $region40
    $region39: #{pconv_encoder_forward.4} parent=5 // pred_region
      %s267 = ssub.s32 %s13, 1
      %s268 = sadd.s32 %s22, %s23
      %s269 = smul.u32 6, %s268
      %p270 = scmp.lt.s32.totalorder %s269, 11
      %s271 = scalar_select %p270, %s269, 11
      %s272 = smul.addr %s271, 4
      %s273 = scalar_lea.vmem %s0, %s272
      %p274 = pneg %p53
      %p275 = pneg %p50
      %s276 = sadd.s32 %s22, %s23
      %s277 = smul.u32 6, %s276
      %p278 = scmp.lt.s32.totalorder %s277, 11
      %s279 = scalar_select %p278, %s277, 11
      %s280 = smul.addr %s279, 8
      %s281 = scalar_lea.vmem %s1, %s280
      %p282 = pneg %p81
      %p283 = pneg %p78
      %s284 = sadd.s32 %s22, %s23
      %s285 = smul.u32 6, %s284
      %p286 = scmp.lt.s32.totalorder %s285, 11
      %s287 = scalar_select %p286, %s285, 11
      %s288 = smul.addr %s287, 8
      %s289 = scalar_lea.vmem %s2, %s288
      %p290 = pneg %p109
      %p291 = pneg %p106
      %p292 = pneg %p130
      %p293 = pneg %p127
      %p294 = pneg %p151
      %p295 = pneg %p148
      %p296 = pneg %p177
      %p297 = pneg %p174
      %p298 = scmp.lt.s32.totalorder %s22, 1
      %s299 = scalar_select %p298, %s22, 1
      %s300 = smul.addr %s299, 8
      %s301 = scalar_lea.vmem %s5, %s300
      %p302 = pneg %p203
      %p303 = pneg %p200
      %p304 = scmp.lt.s32.totalorder %s22, 1
      %s305 = scalar_select %p304, %s22, 1
      %s306 = smul.addr %s305, 8
      %s307 = scalar_lea.vmem %s6, %s306
      %s308 = sadd.s32 %s22, %s23
      %s309 = smul.u32 6, %s308
      %p310 = scmp.lt.s32.totalorder %s309, 11
      %s311 = scalar_select %p310, %s309, 11
      %s312 = smul.addr %s311, 4
      %s313 = scalar_lea.vmem %s0, %s312
      %s314 = sadd.s32 %s22, %s23
      %s315 = smul.u32 6, %s314
      %s316 = sadd.s32 %s22, %s23
      %s317 = smul.u32 6, %s316
      %p318 = scmp.lt.s32.totalorder %s317, 11
      %s319 = scalar_select %p318, %s317, 11
      %s320 = smul.addr %s319, 8
      %s321 = scalar_lea.vmem %s1, %s320
      %s322 = sadd.s32 %s22, %s23
      %s323 = smul.u32 6, %s322
      %s324 = sadd.s32 %s22, %s23
      %s325 = smul.u32 6, %s324
      %p326 = scmp.lt.s32.totalorder %s325, 11
      %s327 = scalar_select %p326, %s325, 11
      %s328 = smul.addr %s327, 8
      %s329 = scalar_lea.vmem %s2, %s328
      %s330 = sadd.s32 %s22, %s23
      %s331 = smul.u32 6, %s330
      %p332 = scmp.lt.s32.totalorder %s22, 1
      %s333 = scalar_select %p332, %s22, 1
      %s334 = smul.addr %s333, 8
      %s335 = scalar_lea.vmem %s5, %s334
      %p336 = scmp.lt.s32.totalorder %s22, 1
      %s337 = scalar_select %p336, %s22, 1
      %s338 = smul.addr %s337, 8
      %s339 = scalar_lea.vmem %s6, %s338
      %p340 = scmp.eq.s32.totalorder %s23, 0
      // Predicated region
      $region41: #{pconv_encoder_forward.4} parent=39 // pred_check
        %p341 = pneg %p340
      $region42: #{pconv_encoder_forward.4} parent=39 // pred_check_branch
        %343 = sbr.rel (%p341) target = $region44
      $region43: #{pconv_encoder_forward.4} parent=39 // pred_region
        %344 = vst [vmem:[%s335] sm:$0xff] 0.0
        %345 = vst [vmem:[%s339] sm:$0xff] 0.0
      $region44: #{pconv_encoder_forward.4} parent=39 // pred_fallthru
        _
      %v346 = vld [vmem:[%s313] sm:$0xf]
      %v347 = vld [vmem:[%s313 + $0x4] sm:$0xf]
      %v348 = vld [vmem:[%s313 + $0x8] sm:$0xf]
      %v349 = vld [vmem:[%s313 + $0xc] sm:$0xf]
      %v350 = vld [vmem:[%s313 + $0x10] sm:$0xf]
      %v351 = vld [vmem:[%s313 + $0x14] sm:$0xf]
      %v352 = vld [vmem:[%s3] sm:$0xf]
      %v353 = vld [vmem:[%s3 + $0x4] sm:$0xf]
      %v354 = vld [vmem:[%s3 + $0x8] sm:$0xf]
      %v355 = vld [vmem:[%s3 + $0xc] sm:$0xf]
      %v356 = vld [vmem:[%s3 + $0x10] sm:$0xf]
      %v357 = vld [vmem:[%s3 + $0x14] sm:$0xf]
      %v358 = vld [vmem:[%s3 + $0x18] sm:$0xf]
      %v359 = vld [vmem:[%s3 + $0x1c] sm:$0xf]
      %v360 = vld [vmem:[%s3 + $0x20] sm:$0xf]
      %v361 = vld [vmem:[%s3 + $0x24] sm:$0xf]
      %v362 = vld [vmem:[%s3 + $0x28] sm:$0xf]
      %v363 = vld [vmem:[%s3 + $0x2c] sm:$0xf]
      %v364 = vld [vmem:[%s3 + $0x30] sm:$0xf]
      %v365 = vld [vmem:[%s3 + $0x34] sm:$0xf]
      %v366 = vld [vmem:[%s3 + $0x38] sm:$0xf]
      %v367 = vld [vmem:[%s3 + $0x3c] sm:$0xf]
      %v374 = vunpack.c.l.b16 %v346
      %v375 = vunpack.c.l.b16 %v347
      %v376 = vunpack.c.l.b16 %v348
      %v377 = vunpack.c.l.b16 %v349
      %v378 = vunpack.c.l.b16 %v350
      %v379 = vunpack.c.l.b16 %v351
      %v380 = vpack.c.b16 %v375, %v374
      %v381 = vpack.c.b16 %v377, %v376
      %v382 = vpack.c.b16 %v379, %v378
      %v402 = vunpack.c.l.b16 %v352
      %v403 = vunpack.c.l.b16 %v353
      %v404 = vunpack.c.l.b16 %v354
      %v405 = vunpack.c.l.b16 %v355
      %v406 = vunpack.c.l.b16 %v356
      %v407 = vunpack.c.l.b16 %v357
      %v408 = vunpack.c.l.b16 %v358
      %v409 = vunpack.c.l.b16 %v359
      %v410 = vunpack.c.l.b16 %v360
      %v411 = vunpack.c.l.b16 %v361
      %v412 = vunpack.c.l.b16 %v362
      %v413 = vunpack.c.l.b16 %v363
      %v414 = vunpack.c.l.b16 %v364
      %v415 = vunpack.c.l.b16 %v365
      %v416 = vunpack.c.l.b16 %v366
      %v417 = vunpack.c.l.b16 %v367
      %v418 = vpack.c.b16 %v403, %v402
      %v419 = vpack.c.b16 %v405, %v404
      %v420 = vpack.c.b16 %v407, %v406
      %v421 = vpack.c.b16 %v409, %v408
      %v422 = vpack.c.b16 %v411, %v410
      %v423 = vpack.c.b16 %v413, %v412
      %v424 = vpack.c.b16 %v415, %v414
      %v425 = vpack.c.b16 %v417, %v416
      %434 = vmatpush.bf16.msra.mxu0 %v425
      %435 = vmatpush.bf16.msra.mxu0 %v424
      %436 = vmatpush.bf16.msra.mxu0 %v423
      %437 = vmatpush.bf16.msra.mxu0 %v422
      %438 = vmatpush.bf16.msra.mxu0 %v421
      %439 = vmatpush.bf16.msra.mxu0 %v420
      %440 = vmatpush.bf16.msra.mxu0 %v419
      %441 = vmatpush.bf16.msra.mxu0 %v418
      %442 = vmatmul.bf16.gmra.mxu0 %v380
      %v443 = vpop.f32.mrf.mxu0
      %v444 = vadd.f32 0.0, %v443
      %v445 = vpop.f32.mrf.mxu0
      %v446 = vadd.f32 0.0, %v445
      %447 = vmatmul.bf16.gmra.mxu0 %v381
      %v448 = vpop.f32.mrf.mxu0
      %v449 = vadd.f32 0.0, %v448
      %v450 = vpop.f32.mrf.mxu0
      %v451 = vadd.f32 0.0, %v450
      %452 = vmatmul.bf16.gmra.mxu0 %v382
      %v453 = vpop.f32.mrf.mxu0
      %v454 = vadd.f32 0.0, %v453
      %v455 = vpop.f32.mrf.mxu0
      %v456 = vadd.f32 0.0, %v455
      %457 = vdwg.mxu0
      %v458 = vld [vmem:[%s321] sm:$0xff]
      %v459 = vld [vmem:[%s321 + $0x8] sm:$0xff]
      %v460 = vld [vmem:[%s321 + $0x10] sm:$0xff]
      %v461 = vld [vmem:[%s321 + $0x18] sm:$0xff]
      %v462 = vld [vmem:[%s321 + $0x20] sm:$0xff]
      %v463 = vld [vmem:[%s321 + $0x28] sm:$0xff]
      %465 = vset.pattern.permute.xlu0 0
      %466 = vperm.xlu0 %465, %v458
      %v467 = vpop.permute.xlu0 %466
      %470 = vset.pattern.permute.xlu0 0
      %471 = vperm.xlu0 %470, %v459
      %v472 = vpop.permute.xlu0 %471
      %475 = vset.pattern.permute.xlu0 0
      %476 = vperm.xlu0 %475, %v460
      %v477 = vpop.permute.xlu0 %476
      %480 = vset.pattern.permute.xlu0 0
      %481 = vperm.xlu0 %480, %v461
      %v482 = vpop.permute.xlu0 %481
      %485 = vset.pattern.permute.xlu0 0
      %486 = vperm.xlu0 %485, %v462
      %v487 = vpop.permute.xlu0 %486
      %490 = vset.pattern.permute.xlu0 0
      %491 = vperm.xlu0 %490, %v463
      %v492 = vpop.permute.xlu0 %491
      %v494 = vmul.f32 %v444, %v467
      %v495 = vmul.f32 %v446, %v472
      %v496 = vmul.f32 %v449, %v477
      %v497 = vmul.f32 %v451, %v482
      %v498 = vmul.f32 %v454, %v487
      %v499 = vmul.f32 %v456, %v492
      %v500 = vld [vmem:[%s4] sm:$0x1]
      %v502 = vperm.slane %v500, 0
      %v504 = vadd.f32 %v494, %v502
      %v505 = vadd.f32 %v495, %v502
      %v506 = vadd.f32 %v496, %v502
      %v507 = vadd.f32 %v497, %v502
      %v508 = vadd.f32 %v498, %v502
      %v509 = vadd.f32 %v499, %v502
      %v510 = vld [vmem:[%s329] sm:$0xff]
      %v511 = vld [vmem:[%s329 + $0x8] sm:$0xff]
      %v512 = vld [vmem:[%s329 + $0x10] sm:$0xff]
      %v513 = vld [vmem:[%s329 + $0x18] sm:$0xff]
      %v514 = vld [vmem:[%s329 + $0x20] sm:$0xff]
      %v515 = vld [vmem:[%s329 + $0x28] sm:$0xff]
      %517 = vset.pattern.permute.xlu0 0
      %518 = vperm.xlu0 %517, %v510
      %v519 = vpop.permute.xlu0 %518
      %522 = vset.pattern.permute.xlu0 0
      %523 = vperm.xlu0 %522, %v511
      %v524 = vpop.permute.xlu0 %523
      %527 = vset.pattern.permute.xlu0 0
      %528 = vperm.xlu0 %527, %v512
      %v529 = vpop.permute.xlu0 %528
      %532 = vset.pattern.permute.xlu0 0
      %533 = vperm.xlu0 %532, %v513
      %v534 = vpop.permute.xlu0 %533
      %537 = vset.pattern.permute.xlu0 0
      %538 = vperm.xlu0 %537, %v514
      %v539 = vpop.permute.xlu0 %538
      %542 = vset.pattern.permute.xlu0 0
      %543 = vperm.xlu0 %542, %v515
      %v544 = vpop.permute.xlu0 %543
      %v546 = vmul.f32 %v504, %v519
      %v547 = vmul.f32 %v505, %v524
      %v548 = vmul.f32 %v506, %v529
      %v549 = vmul.f32 %v507, %v534
      %v550 = vmul.f32 %v508, %v539
      %v551 = vmul.f32 %v509, %v544
      %v552 = vld [vmem:[%s335] sm:$0xff]
      %v553 = vadd.f32 %v546, %v547
      %v554 = vadd.f32 %v553, %v548
      %v555 = vadd.f32 %v554, %v549
      %v556 = vadd.f32 %v555, %v550
      %v557 = vadd.f32 %v556, %v551
      %v558 = vrot.slane %v557, 4
      %v559 = vadd.f32 %v557, %v558
      %v560 = vrot.slane %v559, 2
      %v561 = vadd.f32 %v559, %v560
      %v562 = vrot.slane %v561, 1
      %v563 = vadd.f32 %v561, %v562
      %v564 = vadd.f32 %v552, %v563
      %565 = vst [vmem:[%s335] sm:$0xff] %v564
      %v566 = vld [vmem:[%s339] sm:$0xff]
      %v567 = vmul.f32 %v546, %v546
      %v568 = vmul.f32 %v547, %v547
      %v569 = vmul.f32 %v548, %v548
      %v570 = vmul.f32 %v549, %v549
      %v571 = vmul.f32 %v550, %v550
      %v572 = vmul.f32 %v551, %v551
      %v573 = vadd.f32 %v567, %v568
      %v574 = vadd.f32 %v573, %v569
      %v575 = vadd.f32 %v574, %v570
      %v576 = vadd.f32 %v575, %v571
      %v577 = vadd.f32 %v576, %v572
      %v578 = vrot.slane %v577, 4
      %v579 = vadd.f32 %v577, %v578
      %v580 = vrot.slane %v579, 2
      %v581 = vadd.f32 %v579, %v580
      %v582 = vrot.slane %v581, 1
      %v583 = vadd.f32 %v581, %v582
      %v584 = vadd.f32 %v566, %v583
      %585 = vst [vmem:[%s339] sm:$0xff] %v584
      %p586 = scmp.lt.s32.totalorder %s22, 1
      %s587 = scalar_select %p586, %s22, 1
      %s588 = smul.addr %s587, 8
      %s589 = scalar_lea.vmem %s5, %s588
      %p590 = scmp.lt.s32.totalorder %s22, 1
      %s591 = scalar_select %p590, %s22, 1
      %s592 = smul.addr %s591, 8
      %s593 = scalar_lea.vmem %s6, %s592
      // Predicated region
      $region45: #{pconv_encoder_forward.4} parent=39 // pred_check
        %p594 = pneg %p174
      $region46: #{pconv_encoder_forward.4} parent=39 // pred_check_branch
        %596 = sbr.rel (%p594) target = $region48
      $region47: #{pconv_encoder_forward.4} parent=39 // pred_region
        _
      $region48: #{pconv_encoder_forward.4} parent=39 // pred_fallthru
        _
      // Predicated region
      $region49: #{pconv_encoder_forward.4} parent=39 // pred_check
        %p597 = pneg %p200
      $region50: #{pconv_encoder_forward.4} parent=39 // pred_check_branch
        %599 = sbr.rel (%p597) target = $region52
      $region51: #{pconv_encoder_forward.4} parent=39 // pred_region
        _
      $region52: #{pconv_encoder_forward.4} parent=39 // pred_fallthru
        _
    $region40: #{pconv_encoder_forward.4} parent=5 // pred_fallthru
      _
    %p600 = scmp.le.s32.totalorder 2, %s13
    // Predicated region
    $region53: #{pconv_encoder_forward.4} parent=5 // pred_check
      %p601 = pneg %p600
    $region54: #{pconv_encoder_forward.4} parent=5 // pred_check_branch
      %603 = sbr.rel (%p601) target = $region56
    $region55: #{pconv_encoder_forward.4} parent=5 // pred_region
      %s604 = ssub.s32 %s13, 2
      // Predicated region
      $region57: #{pconv_encoder_forward.4} parent=55 // pred_check
        %p605 = pneg %p180
      $region58: #{pconv_encoder_forward.4} parent=55 // pred_check_branch
        %607 = sbr.rel (%p605) target = $region60
      $region59: #{pconv_encoder_forward.4} parent=55 // pred_region
        %p608 = scmp.lt.s32.totalorder %s24, 1
        %s609 = scalar_select %p608, %s24, 1
        %s610 = smul.addr %s609, 8
        %s611 = scalar_lea.vmem %s5, %s610
      $region60: #{pconv_encoder_forward.4} parent=55 // pred_fallthru
        _
      // Predicated region
      $region61: #{pconv_encoder_forward.4} parent=55 // pred_check
        %p612 = pneg %p206
      $region62: #{pconv_encoder_forward.4} parent=55 // pred_check_branch
        %614 = sbr.rel (%p612) target = $region64
      $region63: #{pconv_encoder_forward.4} parent=55 // pred_region
        %p615 = scmp.lt.s32.totalorder %s24, 1
        %s616 = scalar_select %p615, %s24, 1
        %s617 = smul.addr %s616, 8
        %s618 = scalar_lea.vmem %s6, %s617
      $region64: #{pconv_encoder_forward.4} parent=55 // pred_fallthru
        _
    $region56: #{pconv_encoder_forward.4} parent=5 // pred_fallthru
      _
  $region6: #{pconv_encoder_forward.4} parent=0 // loop_footer
    %s17 = sadd.s32 1, %s13
  $region7: #{pconv_encoder_forward.4} parent=0 // loop_footer_branch
    %12 = sbr.rel target = $region3
  $region8: #{pconv_encoder_forward.4} parent=0 // loop_exit
    _

// kernel: pconv_encoder_forward.3
$region0: #{pconv_encoder_forward.3}
  #allocation0 [shape = 'u32[]', space=smem, size = 0x4, offset = 0x4, fixed_abs, tag = 'smem constant byte address 0x4 - core index']
  #allocation1 [shape = 'u32[72,128]{1,0:T(1,128)}', space=vmem, size = 0x9000, scoped, tag = 'internal scratch']
  %s0 = inlined_call_operand.vmem [shape: bf16[32,128], index: 0, kind: input, shape index: {}]
  %s1 = inlined_call_operand.vmem [shape: f32[32,1], index: 1, kind: input, shape index: {}]
  %s2 = inlined_call_operand.vmem [shape: f32[32,1], index: 2, kind: input, shape index: {}]
  %s3 = inlined_call_operand.vmem [shape: bf16[128,128], index: 3, kind: input, shape index: {}]
  %s4 = inlined_call_operand.vmem [shape: f32[1,128], index: 4, kind: input, shape index: {}]
  %s5 = inlined_call_operand.vmem [shape: f32[32,128], index: 5, kind: output, shape index: {0}]
  %s6 = inlined_call_operand.vmem [shape: f32[16,128], index: 6, kind: output, shape index: {1}]
  %s7 = inlined_call_operand.vmem [shape: f32[16,128], index: 7, kind: output, shape index: {2}]
  %8 = xla_tuple %s5, %s6, %s7
  %s9 = sld [smem:[#allocation0]]
  $region73: #{pconv_encoder_forward.3} parent=0
    _
  %s11 = ssub.s32 1, %s9
  %s12 = scalar_select 0, %s11, %s9
  loop: start=0, step=1, limit=4
  $region2: #{pconv_encoder_forward.3} parent=0 // loop_pre_header
    _
  $region3: #{pconv_encoder_forward.3} parent=0 // loop_header
    %s14 = sphi 0, %s18
    %p15 = scmp.ge.s32.totalorder %s14, 4
    %s21 = sphi 0, %s33
    %s22 = sphi 0, %s29
    %s23 = sphi 0, %s21
    %s24 = sphi 0, %s22
    %s25 = sphi 0, %s23
    %s26 = sphi 0, %s24
    %s38 = sphi 0, %s40
    %s41 = sphi 0, %s38
    %s42 = sphi 0, %s41
    %s58 = sphi 0, %s42
    %s66 = sphi 0, %s68
    %s69 = sphi 0, %s66
    %s70 = sphi 0, %s69
    %s86 = sphi 0, %s70
    %s94 = sphi 0, %s96
    %s97 = sphi 0, %s94
    %s98 = sphi 0, %s97
    %s114 = sphi 0, %s98
    %s118 = sphi 0, %s118
    %s120 = sphi 0, %s118
    %s121 = sphi 0, %s120
    %s135 = sphi 0, %s121
    %s139 = sphi 0, %s139
    %s141 = sphi 0, %s139
    %s142 = sphi 0, %s141
    %s156 = sphi 0, %s142
    %s164 = sphi 0, %s166
    %s167 = sphi 0, %s164
    %s168 = sphi 0, %s167
    %s184 = sphi 0, %s168
    %s190 = sphi 0, %s192
    %s193 = sphi 0, %s190
    %s194 = sphi 0, %s193
    %s210 = sphi 0, %s194
    %s216 = sphi 0, %s218
    %s219 = sphi 0, %s216
    %s220 = sphi 0, %s219
    %s236 = sphi 0, %s220
  $region4: #{pconv_encoder_forward.3} parent=0 // loop_header_branch
    %17 = sbr.rel (%p15) target = $region8
  $region5: #{pconv_encoder_forward.3} parent=0 // loop_body
    %s19 = ssub.s32 %s14, 1
    %s20 = ssub.s32 %s14, 2
    %s27 = sadd.s32 1, %s22
    %p28 = scmp.ge.s32.totalorder %s27, 1
    %s29 = scalar_select %p28, 0, %s27
    %s30 = sadd.s32 1, %s21
    %s31 = scalar_select %p28, %s30, %s21
    %p32 = scmp.ge.s32.totalorder %s31, 2
    %s33 = scalar_select %p32, 0, %s31
    %s34 = sadd.s32 %s21, %s22
    %s35 = sadd.s32 %s33, %s29
    %s36 = ssub.s32 %s34, %s35
    %p37 = scmp.eq.s32.totalorder %s36, 0
    %s39 = sadd.s32 %s38, 1
    %s40 = scalar_select %p37, %s38, %s39
    %p43 = pneg %p37
    %p44 = scmp.eq.s32.totalorder %s14, 1
    %p45 = por %p43, %p44
    %p46 = scmp.ne.s32.totalorder %s38, %s41
    %p47 = scmp.eq.s32.totalorder %s14, 0
    %p48 = por %p46, %p47
    %p49 = scmp.ne.s32.totalorder %s38, %s41
    %p50 = scmp.eq.s32.totalorder %s19, 1
    %p51 = por %p49, %p50
    %p52 = scmp.ne.s32.totalorder %s41, %s42
    %p53 = scmp.eq.s32.totalorder %s19, 0
    %p54 = por %p52, %p53
    %p55 = scmp.ne.s32.totalorder %s41, %s42
    %p56 = scmp.eq.s32.totalorder %s20, 1
    %p57 = por %p55, %p56
    %p59 = scmp.ne.s32.totalorder %s42, %s58
    %p60 = scmp.eq.s32.totalorder %s20, 0
    %p61 = por %p59, %p60
    %s62 = sadd.s32 %s21, %s22
    %s63 = sadd.s32 %s33, %s29
    %s64 = ssub.s32 %s62, %s63
    %p65 = scmp.eq.s32.totalorder %s64, 0
    %s67 = sadd.s32 %s66, 1
    %s68 = scalar_select %p65, %s66, %s67
    %p71 = pneg %p65
    %p72 = scmp.eq.s32.totalorder %s14, 1
    %p73 = por %p71, %p72
    %p74 = scmp.ne.s32.totalorder %s66, %s69
    %p75 = scmp.eq.s32.totalorder %s14, 0
    %p76 = por %p74, %p75
    %p77 = scmp.ne.s32.totalorder %s66, %s69
    %p78 = scmp.eq.s32.totalorder %s19, 1
    %p79 = por %p77, %p78
    %p80 = scmp.ne.s32.totalorder %s69, %s70
    %p81 = scmp.eq.s32.totalorder %s19, 0
    %p82 = por %p80, %p81
    %p83 = scmp.ne.s32.totalorder %s69, %s70
    %p84 = scmp.eq.s32.totalorder %s20, 1
    %p85 = por %p83, %p84
    %p87 = scmp.ne.s32.totalorder %s70, %s86
    %p88 = scmp.eq.s32.totalorder %s20, 0
    %p89 = por %p87, %p88
    %s90 = sadd.s32 %s21, %s22
    %s91 = sadd.s32 %s33, %s29
    %s92 = ssub.s32 %s90, %s91
    %p93 = scmp.eq.s32.totalorder %s92, 0
    %s95 = sadd.s32 %s94, 1
    %s96 = scalar_select %p93, %s94, %s95
    %p99 = pneg %p93
    %p100 = scmp.eq.s32.totalorder %s14, 1
    %p101 = por %p99, %p100
    %p102 = scmp.ne.s32.totalorder %s94, %s97
    %p103 = scmp.eq.s32.totalorder %s14, 0
    %p104 = por %p102, %p103
    %p105 = scmp.ne.s32.totalorder %s94, %s97
    %p106 = scmp.eq.s32.totalorder %s19, 1
    %p107 = por %p105, %p106
    %p108 = scmp.ne.s32.totalorder %s97, %s98
    %p109 = scmp.eq.s32.totalorder %s19, 0
    %p110 = por %p108, %p109
    %p111 = scmp.ne.s32.totalorder %s97, %s98
    %p112 = scmp.eq.s32.totalorder %s20, 1
    %p113 = por %p111, %p112
    %p115 = scmp.ne.s32.totalorder %s98, %s114
    %p116 = scmp.eq.s32.totalorder %s20, 0
    %p117 = por %p115, %p116
    %s119 = sadd.s32 %s118, 1
    %p122 = scmp.eq.s32.totalorder %s14, 1
    %p123 = scmp.ne.s32.totalorder %s118, %s120
    %p124 = scmp.eq.s32.totalorder %s14, 0
    %p125 = por %p123, %p124
    %p126 = scmp.ne.s32.totalorder %s118, %s120
    %p127 = scmp.eq.s32.totalorder %s19, 1
    %p128 = por %p126, %p127
    %p129 = scmp.ne.s32.totalorder %s120, %s121
    %p130 = scmp.eq.s32.totalorder %s19, 0
    %p131 = por %p129, %p130
    %p132 = scmp.ne.s32.totalorder %s120, %s121
    %p133 = scmp.eq.s32.totalorder %s20, 1
    %p134 = por %p132, %p133
    %p136 = scmp.ne.s32.totalorder %s121, %s135
    %p137 = scmp.eq.s32.totalorder %s20, 0
    %p138 = por %p136, %p137
    %s140 = sadd.s32 %s139, 1
    %p143 = scmp.eq.s32.totalorder %s14, 1
    %p144 = scmp.ne.s32.totalorder %s139, %s141
    %p145 = scmp.eq.s32.totalorder %s14, 0
    %p146 = por %p144, %p145
    %p147 = scmp.ne.s32.totalorder %s139, %s141
    %p148 = scmp.eq.s32.totalorder %s19, 1
    %p149 = por %p147, %p148
    %p150 = scmp.ne.s32.totalorder %s141, %s142
    %p151 = scmp.eq.s32.totalorder %s19, 0
    %p152 = por %p150, %p151
    %p153 = scmp.ne.s32.totalorder %s141, %s142
    %p154 = scmp.eq.s32.totalorder %s20, 1
    %p155 = por %p153, %p154
    %p157 = scmp.ne.s32.totalorder %s142, %s156
    %p158 = scmp.eq.s32.totalorder %s20, 0
    %p159 = por %p157, %p158
    %s160 = sadd.s32 %s21, %s22
    %s161 = sadd.s32 %s33, %s29
    %s162 = ssub.s32 %s160, %s161
    %p163 = scmp.eq.s32.totalorder %s162, 0
    %s165 = sadd.s32 %s164, 1
    %s166 = scalar_select %p163, %s164, %s165
    %p169 = pneg %p163
    %p170 = scmp.eq.s32.totalorder %s14, 1
    %p171 = por %p169, %p170
    %p172 = scmp.ne.s32.totalorder %s164, %s167
    %p173 = scmp.eq.s32.totalorder %s14, 0
    %p174 = por %p172, %p173
    %p175 = scmp.ne.s32.totalorder %s164, %s167
    %p176 = scmp.eq.s32.totalorder %s19, 1
    %p177 = por %p175, %p176
    %p178 = scmp.ne.s32.totalorder %s167, %s168
    %p179 = scmp.eq.s32.totalorder %s19, 0
    %p180 = por %p178, %p179
    %p181 = scmp.ne.s32.totalorder %s167, %s168
    %p182 = scmp.eq.s32.totalorder %s20, 1
    %p183 = por %p181, %p182
    %p185 = scmp.ne.s32.totalorder %s168, %s184
    %p186 = scmp.eq.s32.totalorder %s20, 0
    %p187 = por %p185, %p186
    %s188 = ssub.s32 %s21, %s33
    %p189 = scmp.eq.s32.totalorder %s188, 0
    %s191 = sadd.s32 %s190, 1
    %s192 = scalar_select %p189, %s190, %s191
    %p195 = pneg %p189
    %p196 = scmp.eq.s32.totalorder %s14, 1
    %p197 = por %p195, %p196
    %p198 = scmp.ne.s32.totalorder %s190, %s193
    %p199 = scmp.eq.s32.totalorder %s14, 0
    %p200 = por %p198, %p199
    %p201 = scmp.ne.s32.totalorder %s190, %s193
    %p202 = scmp.eq.s32.totalorder %s19, 1
    %p203 = por %p201, %p202
    %p204 = scmp.ne.s32.totalorder %s193, %s194
    %p205 = scmp.eq.s32.totalorder %s19, 0
    %p206 = por %p204, %p205
    %p207 = scmp.ne.s32.totalorder %s193, %s194
    %p208 = scmp.eq.s32.totalorder %s20, 1
    %p209 = por %p207, %p208
    %p211 = scmp.ne.s32.totalorder %s194, %s210
    %p212 = scmp.eq.s32.totalorder %s20, 0
    %p213 = por %p211, %p212
    %s214 = ssub.s32 %s21, %s33
    %p215 = scmp.eq.s32.totalorder %s214, 0
    %s217 = sadd.s32 %s216, 1
    %s218 = scalar_select %p215, %s216, %s217
    %p221 = pneg %p215
    %p222 = scmp.eq.s32.totalorder %s14, 1
    %p223 = por %p221, %p222
    %p224 = scmp.ne.s32.totalorder %s216, %s219
    %p225 = scmp.eq.s32.totalorder %s14, 0
    %p226 = por %p224, %p225
    %p227 = scmp.ne.s32.totalorder %s216, %s219
    %p228 = scmp.eq.s32.totalorder %s19, 1
    %p229 = por %p227, %p228
    %p230 = scmp.ne.s32.totalorder %s219, %s220
    %p231 = scmp.eq.s32.totalorder %s19, 0
    %p232 = por %p230, %p231
    %p233 = scmp.ne.s32.totalorder %s219, %s220
    %p234 = scmp.eq.s32.totalorder %s20, 1
    %p235 = por %p233, %p234
    %p237 = scmp.ne.s32.totalorder %s220, %s236
    %p238 = scmp.eq.s32.totalorder %s20, 0
    %p239 = por %p237, %p238
    %p240 = scmp.le.s32.totalorder 1, %s14
    %p241 = scmp.lt.s32.totalorder %s14, 3
    %p242 = pnand %p240, %p241
    %p243 = pneg %p242
    // Predicated region
    $region9: #{pconv_encoder_forward.3} parent=5 // pred_check
      _
    $region10: #{pconv_encoder_forward.3} parent=5 // pred_check_branch
      %245 = sbr.rel (%p242) target = $region12
    $region11: #{pconv_encoder_forward.3} parent=5 // pred_region
      %s246 = ssub.s32 %s14, 1
      // Predicated region
      $region13: #{pconv_encoder_forward.3} parent=11 // pred_check
        %p247 = pneg %p131
      $region14: #{pconv_encoder_forward.3} parent=11 // pred_check_branch
        %249 = sbr.rel (%p247) target = $region16
      $region15: #{pconv_encoder_forward.3} parent=11 // pred_region
        _
      $region16: #{pconv_encoder_forward.3} parent=11 // pred_fallthru
        _
      // Predicated region
      $region17: #{pconv_encoder_forward.3} parent=11 // pred_check
        %p250 = pneg %p152
      $region18: #{pconv_encoder_forward.3} parent=11 // pred_check_branch
        %252 = sbr.rel (%p250) target = $region20
      $region19: #{pconv_encoder_forward.3} parent=11 // pred_region
        _
      $region20: #{pconv_encoder_forward.3} parent=11 // pred_fallthru
        _
    $region12: #{pconv_encoder_forward.3} parent=5 // pred_fallthru
      _
    %p253 = scmp.lt.s32.totalorder %s14, 2
    // Predicated region
    $region21: #{pconv_encoder_forward.3} parent=5 // pred_check
      %p254 = pneg %p253
    $region22: #{pconv_encoder_forward.3} parent=5 // pred_check_branch
      %256 = sbr.rel (%p254) target = $region24
    $region23: #{pconv_encoder_forward.3} parent=5 // pred_region
      // Predicated region
      $region25: #{pconv_encoder_forward.3} parent=23 // pred_check
        %p257 = pneg %p48
      $region26: #{pconv_encoder_forward.3} parent=23 // pred_check_branch
        %259 = sbr.rel (%p257) target = $region28
      $region27: #{pconv_encoder_forward.3} parent=23 // pred_region
        %s260 = sadd.s32 %s21, %s22
        %s261 = smul.u32 2, %s260
        %p262 = scmp.lt.s32.totalorder %s261, 3
        %s263 = scalar_select %p262, %s261, 3
        %s264 = smul.addr %s263, 4
        %s265 = scalar_lea.vmem %s0, %s264
        %s266 = sadd.s32 %s21, %s22
        %s267 = smul.u32 2, %s266
      $region28: #{pconv_encoder_forward.3} parent=23 // pred_fallthru
        _
      // Predicated region
      $region29: #{pconv_encoder_forward.3} parent=23 // pred_check
        %p268 = pneg %p76
      $region30: #{pconv_encoder_forward.3} parent=23 // pred_check_branch
        %270 = sbr.rel (%p268) target = $region32
      $region31: #{pconv_encoder_forward.3} parent=23 // pred_region
        %s271 = sadd.s32 %s21, %s22
        %s272 = smul.u32 2, %s271
        %p273 = scmp.lt.s32.totalorder %s272, 3
        %s274 = scalar_select %p273, %s272, 3
        %s275 = smul.addr %s274, 8
        %s276 = scalar_lea.vmem %s1, %s275
        %s277 = sadd.s32 %s21, %s22
        %s278 = smul.u32 2, %s277
      $region32: #{pconv_encoder_forward.3} parent=23 // pred_fallthru
        _
      // Predicated region
      $region33: #{pconv_encoder_forward.3} parent=23 // pred_check
        %p279 = pneg %p104
      $region34: #{pconv_encoder_forward.3} parent=23 // pred_check_branch
        %281 = sbr.rel (%p279) target = $region36
      $region35: #{pconv_encoder_forward.3} parent=23 // pred_region
        %s282 = sadd.s32 %s21, %s22
        %s283 = smul.u32 2, %s282
        %p284 = scmp.lt.s32.totalorder %s283, 3
        %s285 = scalar_select %p284, %s283, 3
        %s286 = smul.addr %s285, 8
        %s287 = scalar_lea.vmem %s2, %s286
        %s288 = sadd.s32 %s21, %s22
        %s289 = smul.u32 2, %s288
      $region36: #{pconv_encoder_forward.3} parent=23 // pred_fallthru
        _
    $region24: #{pconv_encoder_forward.3} parent=5 // pred_fallthru
      _
    %p290 = scmp.le.s32.totalorder 1, %s14
    %p291 = scmp.lt.s32.totalorder %s14, 3
    %p292 = pnand %p290, %p291
    %p293 = pneg %p292
    // Predicated region
    $region37: #{pconv_encoder_forward.3} parent=5 // pred_check
      _
    $region38: #{pconv_encoder_forward.3} parent=5 // pred_check_branch
      %295 = sbr.rel (%p292) target = $region40
    $region39: #{pconv_encoder_forward.3} parent=5 // pred_region
      %s296 = ssub.s32 %s14, 1
      %s297 = sadd.s32 %s23, %s24
      %s298 = smul.u32 2, %s297
      %p299 = scmp.lt.s32.totalorder %s298, 3
      %s300 = scalar_select %p299, %s298, 3
      %s301 = smul.addr %s300, 4
      %s302 = scalar_lea.vmem %s0, %s301
      %p303 = pneg %p54
      %p304 = pneg %p51
      %s305 = sadd.s32 %s23, %s24
      %s306 = smul.u32 2, %s305
      %p307 = scmp.lt.s32.totalorder %s306, 3
      %s308 = scalar_select %p307, %s306, 3
      %s309 = smul.addr %s308, 8
      %s310 = scalar_lea.vmem %s1, %s309
      %p311 = pneg %p82
      %p312 = pneg %p79
      %s313 = sadd.s32 %s23, %s24
      %s314 = smul.u32 2, %s313
      %p315 = scmp.lt.s32.totalorder %s314, 3
      %s316 = scalar_select %p315, %s314, 3
      %s317 = smul.addr %s316, 8
      %s318 = scalar_lea.vmem %s2, %s317
      %p319 = pneg %p110
      %p320 = pneg %p107
      %p321 = pneg %p131
      %p322 = pneg %p128
      %p323 = pneg %p152
      %p324 = pneg %p149
      %p325 = pneg %p180
      %p326 = pneg %p177
      %s327 = sadd.s32 %s23, %s24
      %s328 = smul.u32 2, %s327
      %p329 = scmp.lt.s32.totalorder %s328, 3
      %s330 = scalar_select %p329, %s328, 3
      %s331 = smul.addr %s330, 8
      %s332 = scalar_lea.vmem %s5, %s331
      %p333 = pneg %p206
      %p334 = pneg %p203
      %p335 = scmp.lt.s32.totalorder %s23, 1
      %s336 = scalar_select %p335, %s23, 1
      %s337 = smul.addr %s336, 8
      %s338 = scalar_lea.vmem %s6, %s337
      %p339 = pneg %p232
      %p340 = pneg %p229
      %p341 = scmp.lt.s32.totalorder %s23, 1
      %s342 = scalar_select %p341, %s23, 1
      %s343 = smul.addr %s342, 8
      %s344 = scalar_lea.vmem %s7, %s343
      %s345 = sadd.s32 %s23, %s24
      %s346 = smul.u32 2, %s345
      %p347 = scmp.lt.s32.totalorder %s346, 3
      %s348 = scalar_select %p347, %s346, 3
      %s349 = smul.addr %s348, 4
      %s350 = scalar_lea.vmem %s0, %s349
      %s351 = sadd.s32 %s23, %s24
      %s352 = smul.u32 2, %s351
      %s353 = sadd.s32 %s23, %s24
      %s354 = smul.u32 2, %s353
      %p355 = scmp.lt.s32.totalorder %s354, 3
      %s356 = scalar_select %p355, %s354, 3
      %s357 = smul.addr %s356, 8
      %s358 = scalar_lea.vmem %s1, %s357
      %s359 = sadd.s32 %s23, %s24
      %s360 = smul.u32 2, %s359
      %s361 = sadd.s32 %s23, %s24
      %s362 = smul.u32 2, %s361
      %p363 = scmp.lt.s32.totalorder %s362, 3
      %s364 = scalar_select %p363, %s362, 3
      %s365 = smul.addr %s364, 8
      %s366 = scalar_lea.vmem %s2, %s365
      %s367 = sadd.s32 %s23, %s24
      %s368 = smul.u32 2, %s367
      %s369 = sadd.s32 %s23, %s24
      %s370 = smul.u32 2, %s369
      %p371 = scmp.lt.s32.totalorder %s370, 3
      %s372 = scalar_select %p371, %s370, 3
      %s373 = smul.addr %s372, 8
      %s374 = scalar_lea.vmem %s5, %s373
      %s375 = sadd.s32 %s23, %s24
      %s376 = smul.u32 2, %s375
      %p377 = scmp.lt.s32.totalorder %s23, 1
      %s378 = scalar_select %p377, %s23, 1
      %s379 = smul.addr %s378, 8
      %s380 = scalar_lea.vmem %s6, %s379
      %p381 = scmp.lt.s32.totalorder %s23, 1
      %s382 = scalar_select %p381, %s23, 1
      %s383 = smul.addr %s382, 8
      %s384 = scalar_lea.vmem %s7, %s383
      %p385 = scmp.eq.s32.totalorder %s24, 0
      // Predicated region
      $region41: #{pconv_encoder_forward.3} parent=39 // pred_check
        %p386 = pneg %p385
      $region42: #{pconv_encoder_forward.3} parent=39 // pred_check_branch
        %388 = sbr.rel (%p386) target = $region44
      $region43: #{pconv_encoder_forward.3} parent=39 // pred_region
        %389 = vst [vmem:[%s380] sm:$0xff] 0.0
        %390 = vst [vmem:[%s384] sm:$0xff] 0.0
      $region44: #{pconv_encoder_forward.3} parent=39 // pred_fallthru
        _
      %v391 = vld [vmem:[%s350] sm:$0xf]
      %v392 = vld [vmem:[%s350 + $0x4] sm:$0xf]
      %v393 = vld [vmem:[%s3] sm:$0xf]
      %v394 = vld [vmem:[%s3 + $0x4] sm:$0xf]
      %v395 = vld [vmem:[%s3 + $0x8] sm:$0xf]
      %v396 = vld [vmem:[%s3 + $0xc] sm:$0xf]
      %v397 = vld [vmem:[%s3 + $0x10] sm:$0xf]
      %v398 = vld [vmem:[%s3 + $0x14] sm:$0xf]
      %v399 = vld [vmem:[%s3 + $0x18] sm:$0xf]
      %v400 = vld [vmem:[%s3 + $0x1c] sm:$0xf]
      %v401 = vld [vmem:[%s3 + $0x20] sm:$0xf]
      %v402 = vld [vmem:[%s3 + $0x24] sm:$0xf]
      %v403 = vld [vmem:[%s3 + $0x28] sm:$0xf]
      %v404 = vld [vmem:[%s3 + $0x2c] sm:$0xf]
      %v405 = vld [vmem:[%s3 + $0x30] sm:$0xf]
      %v406 = vld [vmem:[%s3 + $0x34] sm:$0xf]
      %v407 = vld [vmem:[%s3 + $0x38] sm:$0xf]
      %v408 = vld [vmem:[%s3 + $0x3c] sm:$0xf]
      %v411 = vunpack.c.l.b16 %v391
      %v412 = vunpack.c.l.b16 %v392
      %v413 = vpack.c.b16 %v412, %v411
      %v431 = vunpack.c.l.b16 %v393
      %v432 = vunpack.c.l.b16 %v394
      %v433 = vunpack.c.l.b16 %v395
      %v434 = vunpack.c.l.b16 %v396
      %v435 = vunpack.c.l.b16 %v397
      %v436 = vunpack.c.l.b16 %v398
      %v437 = vunpack.c.l.b16 %v399
      %v438 = vunpack.c.l.b16 %v400
      %v439 = vunpack.c.l.b16 %v401
      %v440 = vunpack.c.l.b16 %v402
      %v441 = vunpack.c.l.b16 %v403
      %v442 = vunpack.c.l.b16 %v404
      %v443 = vunpack.c.l.b16 %v405
      %v444 = vunpack.c.l.b16 %v406
      %v445 = vunpack.c.l.b16 %v407
      %v446 = vunpack.c.l.b16 %v408
      %v447 = vpack.c.b16 %v432, %v431
      %v448 = vpack.c.b16 %v434, %v433
      %v449 = vpack.c.b16 %v436, %v435
      %v450 = vpack.c.b16 %v438, %v437
      %v451 = vpack.c.b16 %v440, %v439
      %v452 = vpack.c.b16 %v442, %v441
      %v453 = vpack.c.b16 %v444, %v443
      %v454 = vpack.c.b16 %v446, %v445
      %463 = vmatpush.bf16.msra.mxu0 %v454
      %464 = vmatpush.bf16.msra.mxu0 %v453
      %465 = vmatpush.bf16.msra.mxu0 %v452
      %466 = vmatpush.bf16.msra.mxu0 %v451
      %467 = vmatpush.bf16.msra.mxu0 %v450
      %468 = vmatpush.bf16.msra.mxu0 %v449
      %469 = vmatpush.bf16.msra.mxu0 %v448
      %470 = vmatpush.bf16.msra.mxu0 %v447
      %471 = vmatmul.bf16.gmra.mxu0 %v413
      %v472 = vpop.f32.mrf.mxu0
      %v473 = vadd.f32 0.0, %v472
      %v474 = vpop.f32.mrf.mxu0
      %v475 = vadd.f32 0.0, %v474
      %476 = vdwg.mxu0
      %v477 = vld [vmem:[%s358] sm:$0xff]
      %v478 = vld [vmem:[%s358 + $0x8] sm:$0xff]
      %480 = vset.pattern.permute.xlu0 0
      %481 = vperm.xlu0 %480, %v477
      %v482 = vpop.permute.xlu0 %481
      %485 = vset.pattern.permute.xlu0 0
      %486 = vperm.xlu0 %485, %v478
      %v487 = vpop.permute.xlu0 %486
      %v489 = vmul.f32 %v473, %v482
      %v490 = vmul.f32 %v475, %v487
      %v491 = vld [vmem:[%s4] sm:$0x1]
      %v493 = vperm.slane %v491, 0
      %v495 = vadd.f32 %v489, %v493
      %v496 = vadd.f32 %v490, %v493
      %v497 = vld [vmem:[%s366] sm:$0xff]
      %v498 = vld [vmem:[%s366 + $0x8] sm:$0xff]
      %500 = vset.pattern.permute.xlu0 0
      %501 = vperm.xlu0 %500, %v497
      %v502 = vpop.permute.xlu0 %501
      %505 = vset.pattern.permute.xlu0 0
      %506 = vperm.xlu0 %505, %v498
      %v507 = vpop.permute.xlu0 %506
      %v509 = vmul.f32 %v495, %v502
      %v510 = vmul.f32 %v496, %v507
      %511 = vst [vmem:[%s374] sm:$0xff] %v509
      %512 = vst [vmem:[%s374 + $0x8] sm:$0xff] %v510
      %v513 = vld [vmem:[%s380] sm:$0xff]
      %v514 = vadd.f32 %v509, %v510
      %v515 = vrot.slane %v514, 4
      %v516 = vadd.f32 %v514, %v515
      %v517 = vrot.slane %v516, 2
      %v518 = vadd.f32 %v516, %v517
      %v519 = vrot.slane %v518, 1
      %v520 = vadd.f32 %v518, %v519
      %v521 = vadd.f32 %v513, %v520
      %522 = vst [vmem:[%s380] sm:$0xff] %v521
      %v523 = vld [vmem:[%s384] sm:$0xff]
      %v524 = vmul.f32 %v509, %v509
      %v525 = vmul.f32 %v510, %v510
      %v526 = vadd.f32 %v524, %v525
      %v527 = vrot.slane %v526, 4
      %v528 = vadd.f32 %v526, %v527
      %v529 = vrot.slane %v528, 2
      %v530 = vadd.f32 %v528, %v529
      %v531 = vrot.slane %v530, 1
      %v532 = vadd.f32 %v530, %v531
      %v533 = vadd.f32 %v523, %v532
      %534 = vst [vmem:[%s384] sm:$0xff] %v533
      %s535 = sadd.s32 %s23, %s24
      %s536 = smul.u32 2, %s535
      %p537 = scmp.lt.s32.totalorder %s536, 3
      %s538 = scalar_select %p537, %s536, 3
      %s539 = smul.addr %s538, 8
      %s540 = scalar_lea.vmem %s5, %s539
      %p541 = scmp.lt.s32.totalorder %s23, 1
      %s542 = scalar_select %p541, %s23, 1
      %s543 = smul.addr %s542, 8
      %s544 = scalar_lea.vmem %s6, %s543
      %p545 = scmp.lt.s32.totalorder %s23, 1
      %s546 = scalar_select %p545, %s23, 1
      %s547 = smul.addr %s546, 8
      %s548 = scalar_lea.vmem %s7, %s547
      // Predicated region
      $region45: #{pconv_encoder_forward.3} parent=39 // pred_check
        %p549 = pneg %p177
      $region46: #{pconv_encoder_forward.3} parent=39 // pred_check_branch
        %551 = sbr.rel (%p549) target = $region48
      $region47: #{pconv_encoder_forward.3} parent=39 // pred_region
        %s552 = sadd.s32 %s23, %s24
        %s553 = smul.u32 2, %s552
      $region48: #{pconv_encoder_forward.3} parent=39 // pred_fallthru
        _
      // Predicated region
      $region49: #{pconv_encoder_forward.3} parent=39 // pred_check
        %p554 = pneg %p203
      $region50: #{pconv_encoder_forward.3} parent=39 // pred_check_branch
        %556 = sbr.rel (%p554) target = $region52
      $region51: #{pconv_encoder_forward.3} parent=39 // pred_region
        _
      $region52: #{pconv_encoder_forward.3} parent=39 // pred_fallthru
        _
      // Predicated region
      $region53: #{pconv_encoder_forward.3} parent=39 // pred_check
        %p557 = pneg %p229
      $region54: #{pconv_encoder_forward.3} parent=39 // pred_check_branch
        %559 = sbr.rel (%p557) target = $region56
      $region55: #{pconv_encoder_forward.3} parent=39 // pred_region
        _
      $region56: #{pconv_encoder_forward.3} parent=39 // pred_fallthru
        _
    $region40: #{pconv_encoder_forward.3} parent=5 // pred_fallthru
      _
    %p560 = scmp.le.s32.totalorder 2, %s14
    // Predicated region
    $region57: #{pconv_encoder_forward.3} parent=5 // pred_check
      %p561 = pneg %p560
    $region58: #{pconv_encoder_forward.3} parent=5 // pred_check_branch
      %563 = sbr.rel (%p561) target = $region60
    $region59: #{pconv_encoder_forward.3} parent=5 // pred_region
      %s564 = ssub.s32 %s14, 2
      // Predicated region
      $region61: #{pconv_encoder_forward.3} parent=59 // pred_check
        %p565 = pneg %p183
      $region62: #{pconv_encoder_forward.3} parent=59 // pred_check_branch
        %567 = sbr.rel (%p565) target = $region64
      $region63: #{pconv_encoder_forward.3} parent=59 // pred_region
        %s568 = sadd.s32 %s25, %s26
        %s569 = smul.u32 2, %s568
        %p570 = scmp.lt.s32.totalorder %s569, 3
        %s571 = scalar_select %p570, %s569, 3
        %s572 = smul.addr %s571, 8
        %s573 = scalar_lea.vmem %s5, %s572
      $region64: #{pconv_encoder_forward.3} parent=59 // pred_fallthru
        _
      // Predicated region
      $region65: #{pconv_encoder_forward.3} parent=59 // pred_check
        %p574 = pneg %p209
      $region66: #{pconv_encoder_forward.3} parent=59 // pred_check_branch
        %576 = sbr.rel (%p574) target = $region68
      $region67: #{pconv_encoder_forward.3} parent=59 // pred_region
        %p577 = scmp.lt.s32.totalorder %s25, 1
        %s578 = scalar_select %p577, %s25, 1
        %s579 = smul.addr %s578, 8
        %s580 = scalar_lea.vmem %s6, %s579
      $region68: #{pconv_encoder_forward.3} parent=59 // pred_fallthru
        _
      // Predicated region
      $region69: #{pconv_encoder_forward.3} parent=59 // pred_check
        %p581 = pneg %p235
      $region70: #{pconv_encoder_forward.3} parent=59 // pred_check_branch
        %583 = sbr.rel (%p581) target = $region72
      $region71: #{pconv_encoder_forward.3} parent=59 // pred_region
        %p584 = scmp.lt.s32.totalorder %s25, 1
        %s585 = scalar_select %p584, %s25, 1
        %s586 = smul.addr %s585, 8
        %s587 = scalar_lea.vmem %s7, %s586
      $region72: #{pconv_encoder_forward.3} parent=59 // pred_fallthru
        _
    $region60: #{pconv_encoder_forward.3} parent=5 // pred_fallthru
      _
  $region6: #{pconv_encoder_forward.3} parent=0 // loop_footer
    %s18 = sadd.s32 1, %s14
  $region7: #{pconv_encoder_forward.3} parent=0 // loop_footer_branch
    %13 = sbr.rel target = $region3
  $region8: #{pconv_encoder_forward.3} parent=0 // loop_exit
    _

// kernel: pconv_encoder_forward.5
$region0: #{pconv_encoder_forward.5}
  #allocation0 [shape = 'u32[]', space=smem, size = 0x4, offset = 0x4, fixed_abs, tag = 'smem constant byte address 0x4 - core index']
  #allocation1 [shape = 'u32[72,128]{1,0:T(1,128)}', space=vmem, size = 0x9000, scoped, tag = 'internal scratch']
  %s0 = inlined_call_operand.vmem [shape: f32[32,128], index: 0, kind: input, shape index: {}]
  %s1 = inlined_call_operand.vmem [shape: f32[8,128], index: 1, kind: input, shape index: {}]
  %s2 = inlined_call_operand.vmem [shape: bf16[32,128], index: 2, kind: output, shape index: {}]
  %s3 = sld [smem:[#allocation0]]
  $region41: #{pconv_encoder_forward.5} parent=0
    _
  %s5 = ssub.s32 1, %s3
  %s6 = scalar_select 0, %s5, %s3
  loop: start=0, step=1, limit=4
  $region2: #{pconv_encoder_forward.5} parent=0 // loop_pre_header
    _
  $region3: #{pconv_encoder_forward.5} parent=0 // loop_header
    %s8 = sphi 0, %s12
    %p9 = scmp.ge.s32.totalorder %s8, 4
    %s18 = sphi 0, %s20
    %s21 = sphi 0, %s18
    %s22 = sphi 0, %s21
    %s38 = sphi 0, %s22
    %s42 = sphi 0, %s42
    %s44 = sphi 0, %s42
    %s45 = sphi 0, %s44
    %s59 = sphi 0, %s45
    %s65 = sphi 0, %s67
    %s68 = sphi 0, %s65
    %s69 = sphi 0, %s68
    %s85 = sphi 0, %s69
  $region4: #{pconv_encoder_forward.5} parent=0 // loop_header_branch
    %11 = sbr.rel (%p9) target = $region8
  $region5: #{pconv_encoder_forward.5} parent=0 // loop_body
    %s13 = ssub.s32 %s8, 1
    %s14 = ssub.s32 %s8, 2
    %s15 = sadd.s32 %s8, 1
    %s16 = ssub.s32 %s8, %s15
    %p17 = scmp.eq.s32.totalorder %s16, 0
    %s19 = sadd.s32 %s18, 1
    %s20 = scalar_select %p17, %s18, %s19
    %p23 = pneg %p17
    %p24 = scmp.eq.s32.totalorder %s8, 1
    %p25 = por %p23, %p24
    %p26 = scmp.ne.s32.totalorder %s18, %s21
    %p27 = scmp.eq.s32.totalorder %s8, 0
    %p28 = por %p26, %p27
    %p29 = scmp.ne.s32.totalorder %s18, %s21
    %p30 = scmp.eq.s32.totalorder %s13, 1
    %p31 = por %p29, %p30
    %p32 = scmp.ne.s32.totalorder %s21, %s22
    %p33 = scmp.eq.s32.totalorder %s13, 0
    %p34 = por %p32, %p33
    %p35 = scmp.ne.s32.totalorder %s21, %s22
    %p36 = scmp.eq.s32.totalorder %s14, 1
    %p37 = por %p35, %p36
    %p39 = scmp.ne.s32.totalorder %s22, %s38
    %p40 = scmp.eq.s32.totalorder %s14, 0
    %p41 = por %p39, %p40
    %s43 = sadd.s32 %s42, 1
    %p46 = scmp.eq.s32.totalorder %s8, 1
    %p47 = scmp.ne.s32.totalorder %s42, %s44
    %p48 = scmp.eq.s32.totalorder %s8, 0
    %p49 = por %p47, %p48
    %p50 = scmp.ne.s32.totalorder %s42, %s44
    %p51 = scmp.eq.s32.totalorder %s13, 1
    %p52 = por %p50, %p51
    %p53 = scmp.ne.s32.totalorder %s44, %s45
    %p54 = scmp.eq.s32.totalorder %s13, 0
    %p55 = por %p53, %p54
    %p56 = scmp.ne.s32.totalorder %s44, %s45
    %p57 = scmp.eq.s32.totalorder %s14, 1
    %p58 = por %p56, %p57
    %p60 = scmp.ne.s32.totalorder %s45, %s59
    %p61 = scmp.eq.s32.totalorder %s14, 0
    %p62 = por %p60, %p61
    %s63 = ssub.s32 %s8, %s15
    %p64 = scmp.eq.s32.totalorder %s63, 0
    %s66 = sadd.s32 %s65, 1
    %s67 = scalar_select %p64, %s65, %s66
    %p70 = pneg %p64
    %p71 = scmp.eq.s32.totalorder %s8, 1
    %p72 = por %p70, %p71
    %p73 = scmp.ne.s32.totalorder %s65, %s68
    %p74 = scmp.eq.s32.totalorder %s8, 0
    %p75 = por %p73, %p74
    %p76 = scmp.ne.s32.totalorder %s65, %s68
    %p77 = scmp.eq.s32.totalorder %s13, 1
    %p78 = por %p76, %p77
    %p79 = scmp.ne.s32.totalorder %s68, %s69
    %p80 = scmp.eq.s32.totalorder %s13, 0
    %p81 = por %p79, %p80
    %p82 = scmp.ne.s32.totalorder %s68, %s69
    %p83 = scmp.eq.s32.totalorder %s14, 1
    %p84 = por %p82, %p83
    %p86 = scmp.ne.s32.totalorder %s69, %s85
    %p87 = scmp.eq.s32.totalorder %s14, 0
    %p88 = por %p86, %p87
    %p89 = scmp.le.s32.totalorder 1, %s8
    %p90 = scmp.lt.s32.totalorder %s8, 3
    %p91 = pnand %p89, %p90
    %p92 = pneg %p91
    // Predicated region
    $region9: #{pconv_encoder_forward.5} parent=5 // pred_check
      _
    $region10: #{pconv_encoder_forward.5} parent=5 // pred_check_branch
      %94 = sbr.rel (%p91) target = $region12
    $region11: #{pconv_encoder_forward.5} parent=5 // pred_region
      %s95 = ssub.s32 %s8, 1
      // Predicated region
      $region13: #{pconv_encoder_forward.5} parent=11 // pred_check
        %p96 = pneg %p55
      $region14: #{pconv_encoder_forward.5} parent=11 // pred_check_branch
        %98 = sbr.rel (%p96) target = $region16
      $region15: #{pconv_encoder_forward.5} parent=11 // pred_region
        _
      $region16: #{pconv_encoder_forward.5} parent=11 // pred_fallthru
        _
    $region12: #{pconv_encoder_forward.5} parent=5 // pred_fallthru
      _
    %p99 = scmp.lt.s32.totalorder %s8, 2
    // Predicated region
    $region17: #{pconv_encoder_forward.5} parent=5 // pred_check
      %p100 = pneg %p99
    $region18: #{pconv_encoder_forward.5} parent=5 // pred_check_branch
      %102 = sbr.rel (%p100) target = $region20
    $region19: #{pconv_encoder_forward.5} parent=5 // pred_region
      // Predicated region
      $region21: #{pconv_encoder_forward.5} parent=19 // pred_check
        %p103 = pneg %p28
      $region22: #{pconv_encoder_forward.5} parent=19 // pred_check_branch
        %105 = sbr.rel (%p103) target = $region24
      $region23: #{pconv_encoder_forward.5} parent=19 // pred_region
        %s106 = smul.u32 2, %s8
        %p107 = scmp.lt.s32.totalorder %s106, 3
        %s108 = scalar_select %p107, %s106, 3
        %s109 = smul.addr %s108, 8
        %s110 = scalar_lea.vmem %s0, %s109
        %s111 = smul.u32 2, %s8
      $region24: #{pconv_encoder_forward.5} parent=19 // pred_fallthru
        _
    $region20: #{pconv_encoder_forward.5} parent=5 // pred_fallthru
      _
    %p112 = scmp.le.s32.totalorder 1, %s8
    %p113 = scmp.lt.s32.totalorder %s8, 3
    %p114 = pnand %p112, %p113
    %p115 = pneg %p114
    // Predicated region
    $region25: #{pconv_encoder_forward.5} parent=5 // pred_check
      _
    $region26: #{pconv_encoder_forward.5} parent=5 // pred_check_branch
      %117 = sbr.rel (%p114) target = $region28
    $region27: #{pconv_encoder_forward.5} parent=5 // pred_region
      %s118 = ssub.s32 %s8, 1
      %s119 = smul.u32 2, %s13
      %p120 = scmp.lt.s32.totalorder %s119, 3
      %s121 = scalar_select %p120, %s119, 3
      %s122 = smul.addr %s121, 8
      %s123 = scalar_lea.vmem %s0, %s122
      %p124 = pneg %p34
      %p125 = pneg %p31
      %p126 = pneg %p55
      %p127 = pneg %p52
      %p128 = pneg %p81
      %p129 = pneg %p78
      %s130 = smul.u32 2, %s13
      %p131 = scmp.lt.s32.totalorder %s130, 3
      %s132 = scalar_select %p131, %s130, 3
      %s133 = smul.addr %s132, 4
      %s134 = scalar_lea.vmem %s2, %s133
      %s135 = smul.u32 2, %s13
      %p136 = scmp.lt.s32.totalorder %s135, 3
      %s137 = scalar_select %p136, %s135, 3
      %s138 = smul.addr %s137, 8
      %s139 = scalar_lea.vmem %s0, %s138
      %s140 = smul.u32 2, %s13
      %s141 = smul.u32 2, %s13
      %p142 = scmp.lt.s32.totalorder %s141, 3
      %s143 = scalar_select %p142, %s141, 3
      %s144 = smul.addr %s143, 4
      %s145 = scalar_lea.vmem %s2, %s144
      %s146 = smul.u32 2, %s13
      %v147 = vld [vmem:[%s139] sm:$0xff]
      %v148 = vld [vmem:[%s139 + $0x8] sm:$0xff]
      %v149 = vld [vmem:[%s1] sm:$0x1]
      %v150 = vperm.slane %v149, 0
      %v151 = vmul.f32 %v147, %v150
      %v152 = vmul.f32 %v148, %v150
      %v153 = vld [vmem:[%s1 + $0x1] sm:$0x1]
      %v154 = vperm.slane %v153, 0
      %v155 = vadd.f32 %v151, %v154
      %v156 = vadd.f32 %v152, %v154
      %v157 = vmax.f32 %v155, 0.0
      %v158 = vmax.f32 %v156, 0.0
      %v159 = vpack.c.bf16 %v157, %v157
      %v160 = vpack.c.bf16 %v158, %v158
      %161 = vst [vmem:[%s145] sm:$0xf] %v159
      %162 = vst [vmem:[%s145 + $0x4] sm:$0xf] %v160
      %s163 = smul.u32 2, %s13
      %p164 = scmp.lt.s32.totalorder %s163, 3
      %s165 = scalar_select %p164, %s163, 3
      %s166 = smul.addr %s165, 4
      %s167 = scalar_lea.vmem %s2, %s166
      // Predicated region
      $region29: #{pconv_encoder_forward.5} parent=27 // pred_check
        %p168 = pneg %p78
      $region30: #{pconv_encoder_forward.5} parent=27 // pred_check_branch
        %170 = sbr.rel (%p168) target = $region32
      $region31: #{pconv_encoder_forward.5} parent=27 // pred_region
        %s171 = smul.u32 2, %s13
      $region32: #{pconv_encoder_forward.5} parent=27 // pred_fallthru
        _
    $region28: #{pconv_encoder_forward.5} parent=5 // pred_fallthru
      _
    %p172 = scmp.le.s32.totalorder 2, %s8
    // Predicated region
    $region33: #{pconv_encoder_forward.5} parent=5 // pred_check
      %p173 = pneg %p172
    $region34: #{pconv_encoder_forward.5} parent=5 // pred_check_branch
      %175 = sbr.rel (%p173) target = $region36
    $region35: #{pconv_encoder_forward.5} parent=5 // pred_region
      %s176 = ssub.s32 %s8, 2
      // Predicated region
      $region37: #{pconv_encoder_forward.5} parent=35 // pred_check
        %p177 = pneg %p84
      $region38: #{pconv_encoder_forward.5} parent=35 // pred_check_branch
        %179 = sbr.rel (%p177) target = $region40
      $region39: #{pconv_encoder_forward.5} parent=35 // pred_region
        %s180 = smul.u32 2, %s14
        %p181 = scmp.lt.s32.totalorder %s180, 3
        %s182 = scalar_select %p181, %s180, 3
        %s183 = smul.addr %s182, 4
        %s184 = scalar_lea.vmem %s2, %s183
      $region40: #{pconv_encoder_forward.5} parent=35 // pred_fallthru
        _
    $region36: #{pconv_encoder_forward.5} parent=5 // pred_fallthru
      _
  $region6: #{pconv_encoder_forward.5} parent=0 // loop_footer
    %s12 = sadd.s32 1, %s8
  $region7: #{pconv_encoder_forward.5} parent=0 // loop_footer_branch
    %7 = sbr.rel target = $region3
  $region8: #{pconv_encoder_forward.5} parent=0 // loop_exit
    _

</llo_original>
